<compile_context>
chip_gen: v6e
topology: v6e:2x2x1
jax: 0.10.0
libtpu: 0.0.40
codegen_flags: <defaults>
</compile_context>

<pallas_src>
import functools

import jax
import jax.numpy as jnp
import numpy as np
from jax import lax
from jax.experimental import pallas as pl
from jax.experimental.pallas import tpu as pltpu


def _round_up(x, m):
    return ((x + m - 1) // m) * m


# ----------------------------------------------------------------------------
# Kernels
# ----------------------------------------------------------------------------
def _onehot_kernel(edges_ref, idx_ref, nodes_wr_ref, nodes_ws_ref,
                   glob_wg_ref, we_ref, out_ref, *, node_chunk):
    """Small-N path: row gathers as one-hot MXU matmuls; node dim chunked so
    the one-hot intermediates stay inside the vreg file."""
    f32 = jnp.float32
    cdt = nodes_wr_ref.dtype
    te = edges_ref.shape[0]
    n_nodes = nodes_wr_ref.shape[0]          # padded to a multiple of node_chunk
    n_graphs = glob_wg_ref.shape[0]

    idx = idx_ref[...]                        # (te, 8) int32: recv / send / graph
    recv = idx[:, 0:1]
    send = idx[:, 1:2]
    egr = idx[:, 2:3]

    # concat([e, r, s, g]) @ W == e@We + r@Wr + s@Ws + g@Wg (exact identity);
    # the r/s/g factors are pre-folded into the gathered tables outside.
    acc = jnp.dot(edges_ref[...], we_ref[...], preferred_element_type=f32)

    # Globals (+ bias folded in) kept in f32: tiny table, exact bias.
    graph_iota = lax.broadcasted_iota(jnp.int32, (te, n_graphs), 1)
    glob_oh = (graph_iota == egr).astype(f32)
    acc += jnp.dot(glob_oh, glob_wg_ref[...], preferred_element_type=f32)

    n_chunks = n_nodes // node_chunk

    if n_chunks == 1:
        node_iota = lax.broadcasted_iota(jnp.int32, (te, n_nodes), 1)
        r_oh = (node_iota == recv).astype(cdt)
        s_oh = (node_iota == send).astype(cdt)
        acc += jnp.dot(r_oh, nodes_wr_ref[...], preferred_element_type=f32)
        acc += jnp.dot(s_oh, nodes_ws_ref[...], preferred_element_type=f32)
    else:
        def body(c, acc):
            base = pl.multiple_of(c * node_chunk, node_chunk)
            iota = lax.broadcasted_iota(jnp.int32, (te, node_chunk), 1) + base
            r_oh = (iota == recv).astype(cdt)
            s_oh = (iota == send).astype(cdt)
            acc += jnp.dot(r_oh, nodes_wr_ref[pl.ds(base, node_chunk), :],
                           preferred_element_type=f32)
            acc += jnp.dot(s_oh, nodes_ws_ref[pl.ds(base, node_chunk), :],
                           preferred_element_type=f32)
            return acc

        acc = lax.fori_loop(0, n_chunks, body, acc, unroll=True)

    out_ref[...] = jnp.maximum(acc, 0.0).astype(out_ref.dtype)   # ReLU


def _gathered_proj_kernel(edges_ref, idx_ref, recvn_ref, sendn_ref,
                          glob_wg_ref, we_ref, wr_ref, ws_ref, out_ref):
    """Large-N path (Dn < Dp): raw node rows are gathered outside (Dn wide,
    less HBM traffic) and projected in-kernel; globals stay resident."""
    f32 = jnp.float32
    te = edges_ref.shape[0]
    n_graphs = glob_wg_ref.shape[0]
    egr = idx_ref[:, 2:3]

    acc = jnp.dot(edges_ref[...], we_ref[...], preferred_element_type=f32)
    acc += jnp.dot(recvn_ref[...], wr_ref[...], preferred_element_type=f32)
    acc += jnp.dot(sendn_ref[...], ws_ref[...], preferred_element_type=f32)

    graph_iota = lax.broadcasted_iota(jnp.int32, (te, n_graphs), 1)
    glob_oh = (graph_iota == egr).astype(f32)
    acc += jnp.dot(glob_oh, glob_wg_ref[...], preferred_element_type=f32)

    out_ref[...] = jnp.maximum(acc, 0.0).astype(out_ref.dtype)


def _gathered_presum_kernel(edges_ref, presum_ref, we_ref, out_ref):
    """Large-N path (Dn >= Dp): node/global contributions pre-summed in XLA,
    streamed as a single (te, Dp) array."""
    f32 = jnp.float32
    acc = jnp.dot(edges_ref[...], we_ref[...], preferred_element_type=f32)
    acc += presum_ref[...].astype(f32)
    out_ref[...] = jnp.maximum(acc, 0.0).astype(out_ref.dtype)


# ----------------------------------------------------------------------------
# Wrapper
# ----------------------------------------------------------------------------
def _tpu_budget():
    """Best-effort (vmem_capacity_bytes, default gather_threshold) per chip."""
    vmem_cap = 64 << 20        # conservative fallback (v7x-sized VMEM)
    threshold = 1024
    try:
        vmem_cap = int(pltpu.get_tpu_info().vmem_capacity_bytes)
    except Exception:
        pass
    try:
        kind = jax.devices()[0].device_kind.lower()
        if "v5 lite" in kind or "v5e" in kind or "v5lite" in kind:
            threshold = 640    # 197 TF/s MXU vs 0.82 TB/s HBM crossover
        elif "v6" in kind:
            threshold = 2048   # 918 TF/s vs 1.4 TB/s
        else:
            threshold = 1024   # v7x-class: 3.2 TB/s HBM favours streaming earlier
    except Exception:
        pass
    return vmem_cap, threshold


def edge_block_forward(edges, nodes, globals_, receivers, senders, n_edge,
                       w, b, *, tile_e=None, node_chunk=256,
                       gather_threshold=None, compute_dtype=jnp.bfloat16,
                       out_dtype=jnp.float32):
    """EdgeBlock forward. w: (De + 2*Dn + Dg, Dout), b: (Dout,)."""
    E, De = edges.shape
    N, Dn = nodes.shape
    G, Dg = globals_.shape
    Din, Dout = w.shape
    assert Din == De + 2 * Dn + Dg

    f32 = jnp.float32
    w = w.astype(f32)
    b = b.astype(f32)

    # ---- hardware budget & path selection (bytes, not just node count) -----
    vmem_cap, default_threshold = _tpu_budget()
    if gather_threshold is None:
        gather_threshold = default_threshold
    vmem_limit = int(max(32 << 20, int(vmem_cap * 0.75)))

    Dp = _round_up(Dout, 128)                 # lane-dense output width
    pad_d = Dp - Dout
    itemsize_c = np.dtype(compute_dtype).itemsize
    out_item = np.dtype(out_dtype).itemsize

    table_bytes = (2 * _round_up(max(N, 8), 8) * Dp * itemsize_c   # nodes@Wr/Ws
                   + G * Dp * 4                                    # globals (f32)
                   + De * Dp * itemsize_c)                         # W_edges
    fits_vmem = 2 * table_bytes < vmem_limit // 2                  # 2x: worst-case dbl buf
    use_onehot = (N <= gather_threshold) and fits_vmem

    # ---- tile size: per-path default, >=2 grid steps, never larger than E --
    if tile_e is None:
        tile_e = 256 if use_onehot else 512
    tile_e = min(tile_e, _round_up(E, 8))
    if E > 8:
        tile_e = min(tile_e, _round_up((E + 1) // 2, 8))
    tile_e = max(8, _round_up(tile_e, 8))

    Ep = _round_up(E, tile_e)
    pad_e = Ep - E

    def padd(m):                               # pad last dim to Dp (skip if aligned)
        return m if pad_d == 0 else jnp.pad(m, ((0, 0), (0, pad_d)))

    # Split the concat weight per input block; pre-fold where profitable.
    we_f = w[:De]
    wr_f = w[De:De + Dn]
    ws_f = w[De + Dn:De + 2 * Dn]
    wg_f = w[De + 2 * Dn:]

    we = padd(we_f).astype(compute_dtype)                          # (De, Dp)
    glob_wg = padd(globals_.astype(f32) @ wg_f + b[None, :])       # (G, Dp) f32

    # Edge -> graph id ("repeat globals by n_edge"), traceable under jit.
    n_edge = jnp.asarray(n_edge, dtype=jnp.int32)
    edge_graph = jnp.searchsorted(
        jnp.cumsum(n_edge), jnp.arange(E, dtype=jnp.int32),
        side="right").astype(jnp.int32)

    # Pad edge dimension (skipped when already aligned).
    edges_p = edges.astype(compute_dtype)
    recv_i = receivers.astype(jnp.int32)
    send_i = senders.astype(jnp.int32)
    egr_i = edge_graph
    if pad_e:
        edges_p = jnp.pad(edges_p, ((0, pad_e), (0, 0)))
        recv_i = jnp.pad(recv_i, (0, pad_e), constant_values=-1)
        send_i = jnp.pad(send_i, (0, pad_e), constant_values=-1)
        egr_i = jnp.pad(egr_i, (0, pad_e), constant_values=-1)

    # Packed indices -> single (Ep, 8) int32 input (one index DMA per tile).
    idx = jnp.full((Ep, 8), -1, dtype=jnp.int32)
    idx = idx.at[:, 0].set(recv_i).at[:, 1].set(send_i).at[:, 2].set(egr_i)

    grid = (Ep // tile_e,)
    tiled = lambda i: (i, 0)
    whole = lambda i: (0, 0)
    cparams = pltpu.CompilerParams(dimension_semantics=("parallel",),
                                   vmem_limit_bytes=vmem_limit)

    if use_onehot:
        # ---- small-N path: resident pre-folded tables, one-hot MXU gathers --
        chunk = min(node_chunk, _round_up(N, 8))
        chunk = max(8, (chunk // 8) * 8)
        Np = _round_up(N, chunk)
        pad_n = Np - N

        nodes_f = nodes.astype(f32)
        nodes_wr = padd(nodes_f @ wr_f)
        nodes_ws = padd(nodes_f @ ws_f)
        if pad_n:
            nodes_wr = jnp.pad(nodes_wr, ((0, pad_n), (0, 0)))
            nodes_ws = jnp.pad(nodes_ws, ((0, pad_n), (0, 0)))
        nodes_wr = nodes_wr.astype(compute_dtype)
        nodes_ws = nodes_ws.astype(compute_dtype)

        kernel = functools.partial(_onehot_kernel, node_chunk=chunk)
        cost = pl.CostEstimate(
            flops=int(2 * Ep * Dp * (De + 2 * Np + G)),
            transcendentals=0,
            bytes_accessed=int(Ep * De * itemsize_c + Ep * 8 * 4
                               + 2 * Np * Dp * itemsize_c + G * Dp * 4
                               + De * Dp * itemsize_c + Ep * Dp * out_item))

        def run(single_buffer_tables):
            # Resident (block-index-invariant) tables don't need double
            # buffering; request single buffering, fall back if unsupported.
            tmode = ({"pipeline_mode": pl.Buffered(1)}
                     if single_buffer_tables else {})
            return pl.pallas_call(
                kernel,
                out_shape=jax.ShapeDtypeStruct((Ep, Dp), out_dtype),
                grid_spec=pltpu.PrefetchScalarGridSpec(
                    num_scalar_prefetch=0,
                    grid=grid,
                    in_specs=[
                        pl.BlockSpec((tile_e, De), tiled),          # edges
                        pl.BlockSpec((tile_e, 8), tiled),           # packed indices
                        pl.BlockSpec((Np, Dp), whole, **tmode),     # nodes @ Wr
                        pl.BlockSpec((Np, Dp), whole, **tmode),     # nodes @ Ws
                        pl.BlockSpec((G, Dp), whole, **tmode),      # globals@Wg + b
                        pl.BlockSpec((De, Dp), whole, **tmode),     # W_edges
                    ],
                    out_specs=pl.BlockSpec((tile_e, Dp), tiled),
                ),
                compiler_params=cparams,
                cost_estimate=cost,
            )(edges_p, idx, nodes_wr, nodes_ws, glob_wg, we)

        try:
            out_p = run(True)
        except Exception:
            out_p = run(False)

    else:
        safe_n = lambda i: jnp.clip(i, 0, N - 1)   # padded rows sliced away below

        if Dn < Dp:
            # ---- large-N, narrow nodes: gather raw Dn-wide rows, project in
            # kernel (Wr/Ws resident). Streams ~2*E*Dn bytes instead of 2*E*Dp.
            nodes_c = nodes.astype(compute_dtype)
            recv_rows = jnp.take(nodes_c, safe_n(recv_i), axis=0)   # (Ep, Dn)
            send_rows = jnp.take(nodes_c, safe_n(send_i), axis=0)   # (Ep, Dn)
            wr = padd(wr_f).astype(compute_dtype)                   # (Dn, Dp)
            ws = padd(ws_f).astype(compute_dtype)

            cost = pl.CostEstimate(
                flops=int(2 * Ep * Dp * (De + 2 * Dn + G)),
                transcendentals=0,
                bytes_accessed=int(Ep * (De + 2 * Dn) * itemsize_c + Ep * 8 * 4
                                   + (2 * Dn + De) * Dp * itemsize_c
                                   + G * Dp * 4 + Ep * Dp * out_item))
            out_p = pl.pallas_call(
                _gathered_proj_kernel,
                out_shape=jax.ShapeDtypeStruct((Ep, Dp), out_dtype),
                grid_spec=pltpu.PrefetchScalarGridSpec(
                    num_scalar_prefetch=0,
                    grid=grid,
                    in_specs=[
                        pl.BlockSpec((tile_e, De), tiled),    # edges
                        pl.BlockSpec((tile_e, 8), tiled),     # packed indices
                        pl.BlockSpec((tile_e, Dn), tiled),    # gathered recv rows
                        pl.BlockSpec((tile_e, Dn), tiled),    # gathered send rows
                        pl.BlockSpec((G, Dp), whole),         # globals@Wg + b
                        pl.BlockSpec((De, Dp), whole),        # W_edges
                        pl.BlockSpec((Dn, Dp), whole),        # W_recv
                        pl.BlockSpec((Dn, Dp), whole),        # W_send
                    ],
                    out_specs=pl.BlockSpec((tile_e, Dp), tiled),
                ),
                compiler_params=cparams,
                cost_estimate=cost,
            )(edges_p, idx, recv_rows, send_rows, glob_wg, we, wr, ws)
        else:
            # ---- large-N, wide nodes: pre-sum projected contributions in XLA,
            # stream a single (Ep, Dp) array through the kernel.
            nodes_f = nodes.astype(f32)
            nodes_wr = padd(nodes_f @ wr_f)
            nodes_ws = padd(nodes_f @ ws_f)
            presum = (jnp.take(nodes_wr, safe_n(recv_i), axis=0)
                      + jnp.take(nodes_ws, safe_n(send_i), axis=0)
                      + jnp.take(glob_wg, jnp.clip(egr_i, 0, G - 1), axis=0))
            presum = presum.astype(compute_dtype)

            cost = pl.CostEstimate(
                flops=int(2 * Ep * Dp * De),
                transcendentals=0,
                bytes_accessed=int(Ep * De * itemsize_c + Ep * Dp * itemsize_c
                                   + De * Dp * itemsize_c + Ep * Dp * out_item))
            out_p = pl.pallas_call(
                _gathered_presum_kernel,
                out_shape=jax.ShapeDtypeStruct((Ep, Dp), out_dtype),
                grid_spec=pltpu.PrefetchScalarGridSpec(
                    num_scalar_prefetch=0,
                    grid=grid,
                    in_specs=[
                        pl.BlockSpec((tile_e, De), tiled),    # edges
                        pl.BlockSpec((tile_e, Dp), tiled),    # pre-summed contrib
                        pl.BlockSpec((De, Dp), whole),        # W_edges
                    ],
                    out_specs=pl.BlockSpec((tile_e, Dp), tiled),
                ),
                compiler_params=cparams,
                cost_estimate=cost,
            )(edges_p, presum, we)

    if pad_e == 0 and pad_d == 0:
        return out_p                      # no extra HBM pass when already aligned
    return out_p[:E, :Dout]


def reference_forward(edges, nodes, globals_, receivers, senders, n_edge, w, b):
    E = edges.shape[0]
    n_edge = jnp.asarray(n_edge, dtype=jnp.int32)
    edge_graph = jnp.searchsorted(
        jnp.cumsum(n_edge), jnp.arange(E, dtype=jnp.int32), side="right")
    collected = jnp.concatenate(
        [edges, nodes[receivers], nodes[senders], globals_[edge_graph]], axis=-1)
    return jnp.maximum(collected @ w + b, 0.0)


if __name__ == "__main__":
    key = jax.random.PRNGKey(0)
    keys = jax.random.split(key, 12)

    # Graph: 2 graphs, 24 nodes, 16 edges; edge model (De+2*Dn+Dg) -> Dout.
    E, N, G = 16, 24, 2
    De, Dn, Dg, Dout = 4, 8, 4, 32
    n_edge = jnp.array([10, 6], dtype=jnp.int32)            # sums to E

    edges = jax.random.normal(keys[0], (E, De), dtype=jnp.float32)
    nodes = jax.random.normal(keys[1], (N, Dn), dtype=jnp.float32)
    globals_ = jax.random.normal(keys[2], (G, Dg), dtype=jnp.float32)
    receivers = jax.random.randint(keys[3], (E,), 0, N, dtype=jnp.int32)
    senders = jax.random.randint(keys[4], (E,), 0, N, dtype=jnp.int32)

    Din = De + 2 * Dn + Dg
    w = jax.random.normal(keys[5], (Din, Dout), dtype=jnp.float32) * 0.1
    b = jax.random.normal(keys[6], (Dout,), dtype=jnp.float32) * 0.1

    ref = reference_forward(edges, nodes, globals_, receivers, senders,
                            n_edge, w, b)

    # Path A: resident one-hot tables (single node chunk).
    out_a = jax.block_until_ready(edge_block_forward(
        edges, nodes, globals_, receivers, senders, n_edge, w, b))
    np.testing.assert_allclose(np.asarray(out_a), np.asarray(ref),
                               rtol=2e-2, atol=2e-2)

    # Path A with forced node chunking (exercises the in-kernel fori_loop).
    out_a2 = jax.block_until_ready(edge_block_forward(
        edges, nodes, globals_, receivers, senders, n_edge, w, b, node_chunk=8))
    np.testing.assert_allclose(np.asarray(out_a2), np.asarray(ref),
                               rtol=2e-2, atol=2e-2)

    # Path B1: streamed gather of raw node rows + in-kernel projection (Dn < Dp).
    out_b = jax.block_until_ready(edge_block_forward(
        edges, nodes, globals_, receivers, senders, n_edge, w, b,
        gather_threshold=0))
    np.testing.assert_allclose(np.asarray(out_b), np.asarray(ref),
                               rtol=2e-2, atol=2e-2)

    # Path B2: wide nodes (Dn >= Dp) -> pre-summed single streamed array.
    N2, Dn2 = 8, 128
    nodes2 = jax.random.normal(keys[7], (N2, Dn2), dtype=jnp.float32)
    receivers2 = jax.random.randint(keys[8], (E,), 0, N2, dtype=jnp.int32)
    senders2 = jax.random.randint(keys[9], (E,), 0, N2, dtype=jnp.int32)
    Din2 = De + 2 * Dn2 + Dg
    w2 = jax.random.normal(keys[10], (Din2, Dout), dtype=jnp.float32) * 0.05
    ref2 = reference_forward(edges, nodes2, globals_, receivers2, senders2,
                             n_edge, w2, b)
    out_c = jax.block_until_ready(edge_block_forward(
        edges, nodes2, globals_, receivers2, senders2, n_edge, w2, b,
        gather_threshold=0))
    np.testing.assert_allclose(np.asarray(out_c), np.asarray(ref2),
                               rtol=2e-2, atol=2e-2)

    print("KERNEL_OK")
</pallas_src>

<mosaic_0001>
module attributes {stable_mosaic.version = 11 : i64} {
  func.func @_onehot_kernel(%arg0: i32, %arg1: memref<8x4xbf16, #tpu.memory_space<vmem>>, %arg2: memref<8x8xi32, #tpu.memory_space<vmem>>, %arg3: memref<24x128xbf16, #tpu.memory_space<vmem>>, %arg4: memref<24x128xbf16, #tpu.memory_space<vmem>>, %arg5: memref<2x128xf32, #tpu.memory_space<vmem>>, %arg6: memref<4x128xbf16, #tpu.memory_space<vmem>>, %arg7: memref<8x128xf32, #tpu.memory_space<vmem>>) attributes {dimension_semantics = [#tpu.dimension_semantics<parallel>], iteration_bounds = array<i64: 2>, scalar_prefetch = 0 : i64, scratch_operands = 0 : i64, tpu.core_type = #tpu.core_type<tc>, window_params = [{transform_indices = @transform_0, window_bounds = array<i64: 8, 4>}, {transform_indices = @transform_1, window_bounds = array<i64: 8, 8>}, {pipeline_mode = #tpu.pipeline_mode<synchronous>, transform_indices = @transform_2, window_bounds = array<i64: 24, 128>}, {pipeline_mode = #tpu.pipeline_mode<synchronous>, transform_indices = @transform_3, window_bounds = array<i64: 24, 128>}, {pipeline_mode = #tpu.pipeline_mode<synchronous>, transform_indices = @transform_4, window_bounds = array<i64: 2, 128>}, {pipeline_mode = #tpu.pipeline_mode<synchronous>, transform_indices = @transform_5, window_bounds = array<i64: 4, 128>}, {transform_indices = @transform_6, window_bounds = array<i64: 8, 128>}]} {
    %c0 = arith.constant 0 : index
    %c0_0 = arith.constant 0 : index
    %0 = vector.load %arg2[%c0, %c0_0] : memref<8x8xi32, #tpu.memory_space<vmem>>, vector<8x8xi32>
    %1 = vector.extract_strided_slice %0 {offsets = [0, 0], sizes = [8, 1], strides = [1, 1]} : vector<8x8xi32> to vector<8x1xi32>
    %2 = vector.extract_strided_slice %0 {offsets = [0, 1], sizes = [8, 1], strides = [1, 1]} : vector<8x8xi32> to vector<8x1xi32>
    %3 = vector.extract_strided_slice %0 {offsets = [0, 2], sizes = [8, 1], strides = [1, 1]} : vector<8x8xi32> to vector<8x1xi32>
    %c0_1 = arith.constant 0 : index
    %c0_2 = arith.constant 0 : index
    %4 = vector.load %arg1[%c0_1, %c0_2] : memref<8x4xbf16, #tpu.memory_space<vmem>>, vector<8x4xbf16>
    %c0_3 = arith.constant 0 : index
    %c0_4 = arith.constant 0 : index
    %5 = vector.load %arg6[%c0_3, %c0_4] : memref<4x128xbf16, #tpu.memory_space<vmem>>, vector<4x128xbf16>
    %cst = arith.constant dense<0.000000e+00> : vector<8x128xf32>
    %6 = tpu.matmul %4, %5, %cst {dimension_numbers = #tpu.dot_dimension_numbers<[1], [0], [0], [1], [0, 0, 1, 1], [], []>} : vector<8x4xbf16>, vector<4x128xbf16>, vector<8x128xf32> -> vector<8x128xf32>
    %7 = tpu.iota {dimensions = array<i32: 1>} : vector<8x2xi32>
    %8 = vector.broadcast %3 : vector<8x1xi32> to vector<8x2xi32>
    %9 = arith.cmpi eq, %7, %8 : vector<8x2xi32>
    %10 = arith.extui %9 : vector<8x2xi1> to vector<8x2xi32>
    %11 = arith.sitofp %10 : vector<8x2xi32> to vector<8x2xf32>
    %c0_5 = arith.constant 0 : index
    %c0_6 = arith.constant 0 : index
    %12 = vector.load %arg5[%c0_5, %c0_6] : memref<2x128xf32, #tpu.memory_space<vmem>>, vector<2x128xf32>
    %cst_7 = arith.constant dense<0.000000e+00> : vector<8x128xf32>
    %13 = tpu.matmul %11, %12, %cst_7 {dimension_numbers = #tpu.dot_dimension_numbers<[1], [0], [0], [1], [0, 0, 1, 1], [], []>} : vector<8x2xf32>, vector<2x128xf32>, vector<8x128xf32> -> vector<8x128xf32>
    %14 = arith.addf %6, %13 : vector<8x128xf32>
    %15 = tpu.iota {dimensions = array<i32: 1>} : vector<8x24xi32>
    %16 = vector.broadcast %1 : vector<8x1xi32> to vector<8x24xi32>
    %17 = arith.cmpi eq, %15, %16 : vector<8x24xi32>
    %18 = arith.extui %17 : vector<8x24xi1> to vector<8x24xi32>
    %19 = arith.sitofp %18 : vector<8x24xi32> to vector<8x24xf32>
    %20 = arith.truncf %19 : vector<8x24xf32> to vector<8x24xbf16>
    %21 = vector.broadcast %2 : vector<8x1xi32> to vector<8x24xi32>
    %22 = arith.cmpi eq, %15, %21 : vector<8x24xi32>
    %23 = arith.extui %22 : vector<8x24xi1> to vector<8x24xi32>
    %24 = arith.sitofp %23 : vector<8x24xi32> to vector<8x24xf32>
    %25 = arith.truncf %24 : vector<8x24xf32> to vector<8x24xbf16>
    %c0_8 = arith.constant 0 : index
    %c0_9 = arith.constant 0 : index
    %26 = vector.load %arg3[%c0_8, %c0_9] : memref<24x128xbf16, #tpu.memory_space<vmem>>, vector<24x128xbf16>
    %cst_10 = arith.constant dense<0.000000e+00> : vector<8x128xf32>
    %27 = tpu.matmul %20, %26, %cst_10 {dimension_numbers = #tpu.dot_dimension_numbers<[1], [0], [0], [1], [0, 0, 1, 1], [], []>} : vector<8x24xbf16>, vector<24x128xbf16>, vector<8x128xf32> -> vector<8x128xf32>
    %28 = arith.addf %14, %27 : vector<8x128xf32>
    %c0_11 = arith.constant 0 : index
    %c0_12 = arith.constant 0 : index
    %29 = vector.load %arg4[%c0_11, %c0_12] : memref<24x128xbf16, #tpu.memory_space<vmem>>, vector<24x128xbf16>
    %cst_13 = arith.constant dense<0.000000e+00> : vector<8x128xf32>
    %30 = tpu.matmul %25, %29, %cst_13 {dimension_numbers = #tpu.dot_dimension_numbers<[1], [0], [0], [1], [0, 0, 1, 1], [], []>} : vector<8x24xbf16>, vector<24x128xbf16>, vector<8x128xf32> -> vector<8x128xf32>
    %31 = arith.addf %28, %30 : vector<8x128xf32>
    %cst_14 = arith.constant 0.000000e+00 : f32
    %32 = vector.broadcast %cst_14 : f32 to vector<8x128xf32>
    %33 = arith.maximumf %31, %32 : vector<8x128xf32>
    %c0_15 = arith.constant 0 : index
    %c0_16 = arith.constant 0 : index
    %34 = vector.load %arg7[%c0_15, %c0_16] : memref<8x128xf32, #tpu.memory_space<vmem>>, vector<8x128xf32>
    tpu.vector_store %arg7[%c0_15, %c0_16], %33 {strides = array<i32>} : memref<8x128xf32, #tpu.memory_space<vmem>>, vector<8x128xf32>,
    return
  }
  func.func @transform_0(%arg0: i32) -> (i32, i32) {
    %c0_i32 = arith.constant 0 : i32
    %c0_i32_0 = arith.constant 0 : i32
    return %arg0, %c0_i32 : i32, i32
  }
  func.func @transform_1(%arg0: i32) -> (i32, i32) {
    %c0_i32 = arith.constant 0 : i32
    %c0_i32_0 = arith.constant 0 : i32
    return %arg0, %c0_i32 : i32, i32
  }
  func.func @transform_2(%arg0: i32) -> (i32, i32) {
    %c0_i32 = arith.constant 0 : i32
    %c0_i32_0 = arith.constant 0 : i32
    %c0_i32_1 = arith.constant 0 : i32
    return %c0_i32, %c0_i32_0 : i32, i32
  }
  func.func @transform_3(%arg0: i32) -> (i32, i32) {
    %c0_i32 = arith.constant 0 : i32
    %c0_i32_0 = arith.constant 0 : i32
    %c0_i32_1 = arith.constant 0 : i32
    return %c0_i32, %c0_i32_0 : i32, i32
  }
  func.func @transform_4(%arg0: i32) -> (i32, i32) {
    %c0_i32 = arith.constant 0 : i32
    %c0_i32_0 = arith.constant 0 : i32
    %c0_i32_1 = arith.constant 0 : i32
    return %c0_i32, %c0_i32_0 : i32, i32
  }
  func.func @transform_5(%arg0: i32) -> (i32, i32) {
    %c0_i32 = arith.constant 0 : i32
    %c0_i32_0 = arith.constant 0 : i32
    %c0_i32_1 = arith.constant 0 : i32
    return %c0_i32, %c0_i32_0 : i32, i32
  }
  func.func @transform_6(%arg0: i32) -> (i32, i32) {
    %c0_i32 = arith.constant 0 : i32
    %c0_i32_0 = arith.constant 0 : i32
    return %arg0, %c0_i32 : i32, i32
  }
}

module attributes {stable_mosaic.version = 11 : i64} {
  func.func @_onehot_kernel(%arg0: i32, %arg1: memref<8x4xbf16, #tpu.memory_space<vmem>>, %arg2: memref<8x8xi32, #tpu.memory_space<vmem>>, %arg3: memref<24x128xbf16, #tpu.memory_space<vmem>>, %arg4: memref<24x128xbf16, #tpu.memory_space<vmem>>, %arg5: memref<2x128xf32, #tpu.memory_space<vmem>>, %arg6: memref<4x128xbf16, #tpu.memory_space<vmem>>, %arg7: memref<8x128xf32, #tpu.memory_space<vmem>>) attributes {dimension_semantics = [#tpu.dimension_semantics<parallel>], iteration_bounds = array<i64: 2>, scalar_prefetch = 0 : i64, scratch_operands = 0 : i64, tpu.core_type = #tpu.core_type<tc>, window_params = [{transform_indices = @transform_0, window_bounds = array<i64: 8, 4>}, {transform_indices = @transform_1, window_bounds = array<i64: 8, 8>}, {pipeline_mode = #tpu.pipeline_mode<synchronous>, transform_indices = @transform_2, window_bounds = array<i64: 24, 128>}, {pipeline_mode = #tpu.pipeline_mode<synchronous>, transform_indices = @transform_3, window_bounds = array<i64: 24, 128>}, {pipeline_mode = #tpu.pipeline_mode<synchronous>, transform_indices = @transform_4, window_bounds = array<i64: 2, 128>}, {pipeline_mode = #tpu.pipeline_mode<synchronous>, transform_indices = @transform_5, window_bounds = array<i64: 4, 128>}, {transform_indices = @transform_6, window_bounds = array<i64: 8, 128>}]} {
    %c0 = arith.constant 0 : index
    %c0_0 = arith.constant 0 : index
    %0 = vector.load %arg2[%c0, %c0_0] : memref<8x8xi32, #tpu.memory_space<vmem>>, vector<8x8xi32>
    %1 = vector.extract_strided_slice %0 {offsets = [0, 0], sizes = [8, 1], strides = [1, 1]} : vector<8x8xi32> to vector<8x1xi32>
    %2 = vector.extract_strided_slice %0 {offsets = [0, 1], sizes = [8, 1], strides = [1, 1]} : vector<8x8xi32> to vector<8x1xi32>
    %3 = vector.extract_strided_slice %0 {offsets = [0, 2], sizes = [8, 1], strides = [1, 1]} : vector<8x8xi32> to vector<8x1xi32>
    %c0_1 = arith.constant 0 : index
    %c0_2 = arith.constant 0 : index
    %4 = vector.load %arg1[%c0_1, %c0_2] : memref<8x4xbf16, #tpu.memory_space<vmem>>, vector<8x4xbf16>
    %c0_3 = arith.constant 0 : index
    %c0_4 = arith.constant 0 : index
    %5 = vector.load %arg6[%c0_3, %c0_4] : memref<4x128xbf16, #tpu.memory_space<vmem>>, vector<4x128xbf16>
    %cst = arith.constant dense<0.000000e+00> : vector<8x128xf32>
    %6 = tpu.matmul %4, %5, %cst {dimension_numbers = #tpu.dot_dimension_numbers<[1], [0], [0], [1], [0, 0, 1, 1], [], []>} : vector<8x4xbf16>, vector<4x128xbf16>, vector<8x128xf32> -> vector<8x128xf32>
    %7 = tpu.iota {dimensions = array<i32: 1>} : vector<8x2xi32>
    %8 = vector.broadcast %3 : vector<8x1xi32> to vector<8x2xi32>
    %9 = arith.cmpi eq, %7, %8 : vector<8x2xi32>
    %10 = arith.extui %9 : vector<8x2xi1> to vector<8x2xi32>
    %11 = arith.sitofp %10 : vector<8x2xi32> to vector<8x2xf32>
    %c0_5 = arith.constant 0 : index
    %c0_6 = arith.constant 0 : index
    %12 = vector.load %arg5[%c0_5, %c0_6] : memref<2x128xf32, #tpu.memory_space<vmem>>, vector<2x128xf32>
    %cst_7 = arith.constant dense<0.000000e+00> : vector<8x128xf32>
    %13 = tpu.matmul %11, %12, %cst_7 {dimension_numbers = #tpu.dot_dimension_numbers<[1], [0], [0], [1], [0, 0, 1, 1], [], []>} : vector<8x2xf32>, vector<2x128xf32>, vector<8x128xf32> -> vector<8x128xf32>
    %14 = arith.addf %6, %13 : vector<8x128xf32>
    %15 = tpu.iota {dimensions = array<i32: 1>} : vector<8x24xi32>
    %16 = vector.broadcast %1 : vector<8x1xi32> to vector<8x24xi32>
    %17 = arith.cmpi eq, %15, %16 : vector<8x24xi32>
    %18 = arith.extui %17 : vector<8x24xi1> to vector<8x24xi32>
    %19 = arith.sitofp %18 : vector<8x24xi32> to vector<8x24xf32>
    %20 = arith.truncf %19 : vector<8x24xf32> to vector<8x24xbf16>
    %21 = vector.broadcast %2 : vector<8x1xi32> to vector<8x24xi32>
    %22 = arith.cmpi eq, %15, %21 : vector<8x24xi32>
    %23 = arith.extui %22 : vector<8x24xi1> to vector<8x24xi32>
    %24 = arith.sitofp %23 : vector<8x24xi32> to vector<8x24xf32>
    %25 = arith.truncf %24 : vector<8x24xf32> to vector<8x24xbf16>
    %c0_8 = arith.constant 0 : index
    %c0_9 = arith.constant 0 : index
    %26 = vector.load %arg3[%c0_8, %c0_9] : memref<24x128xbf16, #tpu.memory_space<vmem>>, vector<24x128xbf16>
    %cst_10 = arith.constant dense<0.000000e+00> : vector<8x128xf32>
    %27 = tpu.matmul %20, %26, %cst_10 {dimension_numbers = #tpu.dot_dimension_numbers<[1], [0], [0], [1], [0, 0, 1, 1], [], []>} : vector<8x24xbf16>, vector<24x128xbf16>, vector<8x128xf32> -> vector<8x128xf32>
    %28 = arith.addf %14, %27 : vector<8x128xf32>
    %c0_11 = arith.constant 0 : index
    %c0_12 = arith.constant 0 : index
    %29 = vector.load %arg4[%c0_11, %c0_12] : memref<24x128xbf16, #tpu.memory_space<vmem>>, vector<24x128xbf16>
    %cst_13 = arith.constant dense<0.000000e+00> : vector<8x128xf32>
    %30 = tpu.matmul %25, %29, %cst_13 {dimension_numbers = #tpu.dot_dimension_numbers<[1], [0], [0], [1], [0, 0, 1, 1], [], []>} : vector<8x24xbf16>, vector<24x128xbf16>, vector<8x128xf32> -> vector<8x128xf32>
    %31 = arith.addf %28, %30 : vector<8x128xf32>
    %cst_14 = arith.constant 0.000000e+00 : f32
    %32 = vector.broadcast %cst_14 : f32 to vector<8x128xf32>
    %33 = arith.maximumf %31, %32 : vector<8x128xf32>
    %c0_15 = arith.constant 0 : index
    %c0_16 = arith.constant 0 : index
    %34 = vector.load %arg7[%c0_15, %c0_16] : memref<8x128xf32, #tpu.memory_space<vmem>>, vector<8x128xf32>
    tpu.vector_store %arg7[%c0_15, %c0_16], %33 {strides = array<i32>} : memref<8x128xf32, #tpu.memory_space<vmem>>, vector<8x128xf32>,
    return
  }
  func.func @transform_0(%arg0: i32) -> (i32, i32) {
    %c0_i32 = arith.constant 0 : i32
    %c0_i32_0 = arith.constant 0 : i32
    return %arg0, %c0_i32 : i32, i32
  }
  func.func @transform_1(%arg0: i32) -> (i32, i32) {
    %c0_i32 = arith.constant 0 : i32
    %c0_i32_0 = arith.constant 0 : i32
    return %arg0, %c0_i32 : i32, i32
  }
  func.func @transform_2(%arg0: i32) -> (i32, i32) {
    %c0_i32 = arith.constant 0 : i32
    %c0_i32_0 = arith.constant 0 : i32
    %c0_i32_1 = arith.constant 0 : i32
    return %c0_i32, %c0_i32_0 : i32, i32
  }
  func.func @transform_3(%arg0: i32) -> (i32, i32) {
    %c0_i32 = arith.constant 0 : i32
    %c0_i32_0 = arith.constant 0 : i32
    %c0_i32_1 = arith.constant 0 : i32
    return %c0_i32, %c0_i32_0 : i32, i32
  }
  func.func @transform_4(%arg0: i32) -> (i32, i32) {
    %c0_i32 = arith.constant 0 : i32
    %c0_i32_0 = arith.constant 0 : i32
    %c0_i32_1 = arith.constant 0 : i32
    return %c0_i32, %c0_i32_0 : i32, i32
  }
  func.func @transform_5(%arg0: i32) -> (i32, i32) {
    %c0_i32 = arith.constant 0 : i32
    %c0_i32_0 = arith.constant 0 : i32
    %c0_i32_1 = arith.constant 0 : i32
    return %c0_i32, %c0_i32_0 : i32, i32
  }
  func.func @transform_6(%arg0: i32) -> (i32, i32) {
    %c0_i32 = arith.constant 0 : i32
    %c0_i32_0 = arith.constant 0 : i32
    return %arg0, %c0_i32 : i32, i32
  }
}

</mosaic_0001>

<llo_original>
// kernel: tpu_custom_call.1
$region0: #{tpu_custom_call.1}
  #allocation0 [shape = 'u32[]', space=smem, size = 0x4, offset = 0x4, fixed_abs, tag = 'smem constant byte address 0x4 - core index']
  #allocation1 [shape = 'u32[144,128]{1,0:T(1,128)}', space=vmem, size = 0x12000, scoped, tag = 'internal scratch']
  %s0 = inlined_call_operand.vmem [shape: bf16[16,4], index: 0, kind: input, shape index: {}]
  %s1 = inlined_call_operand.vmem [shape: s32[16,8], index: 1, kind: input, shape index: {}]
  %s2 = inlined_call_operand.vmem [shape: bf16[24,128], index: 2, kind: input, shape index: {}]
  %s3 = inlined_call_operand.vmem [shape: bf16[24,128], index: 3, kind: input, shape index: {}]
  %s4 = inlined_call_operand.vmem [shape: f32[2,128], index: 4, kind: input, shape index: {}]
  %s5 = inlined_call_operand.vmem [shape: bf16[4,128], index: 5, kind: input, shape index: {}]
  %s6 = inlined_call_operand.hbm [shape: f32[16,128], index: 6, kind: output, shape index: {}]
  %s7 = sld [smem:[#allocation0]]
  $region57: #{tpu_custom_call.1} parent=0
    _
  %s9 = ssub.s32 1, %s7
  %s10 = scalar_select 0, %s9, %s7
  $region1: #{tpu_custom_call.1} parent=0
    #allocation2 [shape = 'u8[8192]{0}', space=vmem, size = 0x2000, scoped, tag = 'output window, operand 0']
    #allocation3 [shape = 's32[2]{0}', space=sflag, size = 0x8, scoped, tag = 'scoped memory for tpu_custom_call.1']
    %11 = vsyncpa [#allocation3], 0
    %s12 = scalar_lea.sflag [#allocation3], 1
    %13 = vsyncpa %s12, 0
    loop: start=0, step=1, limit=4
    $region2: #{tpu_custom_call.1} parent=1 // loop_pre_header
      _
    $region3: #{tpu_custom_call.1} parent=1 // loop_header
      %s15 = sphi 0, %s19
      %p16 = scmp.ge.s32.totalorder %s15, 4
      %s25 = sphi 0, %s27
      %s28 = sphi 0, %s25
      %s29 = sphi 0, %s28
      %s45 = sphi 0, %s29
      %s51 = sphi 0, %s53
      %s54 = sphi 0, %s51
      %s55 = sphi 0, %s54
      %s71 = sphi 0, %s55
      %s75 = sphi 0, %s75
      %s77 = sphi 0, %s75
      %s78 = sphi 0, %s77
      %s92 = sphi 0, %s78
      %s96 = sphi 0, %s96
      %s98 = sphi 0, %s96
      %s99 = sphi 0, %s98
      %s113 = sphi 0, %s99
      %s117 = sphi 0, %s117
      %s119 = sphi 0, %s117
      %s120 = sphi 0, %s119
      %s134 = sphi 0, %s120
      %s138 = sphi 0, %s138
      %s140 = sphi 0, %s138
      %s141 = sphi 0, %s140
      %s155 = sphi 0, %s141
      %s161 = sphi 0, %s163
      %s164 = sphi 0, %s161
      %s165 = sphi 0, %s164
      %s181 = sphi 0, %s165
    $region4: #{tpu_custom_call.1} parent=1 // loop_header_branch
      %18 = sbr.rel (%p16) target = $region8
    $region5: #{tpu_custom_call.1} parent=1 // loop_body
      %s20 = ssub.s32 %s15, 1
      %s21 = ssub.s32 %s15, 2
      %s22 = sadd.s32 %s15, 1
      %s23 = ssub.s32 %s15, %s22
      %p24 = scmp.eq.s32.totalorder %s23, 0
      %s26 = sadd.s32 %s25, 1
      %s27 = scalar_select %p24, %s25, %s26
      %p30 = pneg %p24
      %p31 = scmp.eq.s32.totalorder %s15, 1
      %p32 = por %p30, %p31
      %p33 = scmp.ne.s32.totalorder %s25, %s28
      %p34 = scmp.eq.s32.totalorder %s15, 0
      %p35 = por %p33, %p34
      %p36 = scmp.ne.s32.totalorder %s25, %s28
      %p37 = scmp.eq.s32.totalorder %s20, 1
      %p38 = por %p36, %p37
      %p39 = scmp.ne.s32.totalorder %s28, %s29
      %p40 = scmp.eq.s32.totalorder %s20, 0
      %p41 = por %p39, %p40
      %p42 = scmp.ne.s32.totalorder %s28, %s29
      %p43 = scmp.eq.s32.totalorder %s21, 1
      %p44 = por %p42, %p43
      %p46 = scmp.ne.s32.totalorder %s29, %s45
      %p47 = scmp.eq.s32.totalorder %s21, 0
      %p48 = por %p46, %p47
      %s49 = ssub.s32 %s15, %s22
      %p50 = scmp.eq.s32.totalorder %s49, 0
      %s52 = sadd.s32 %s51, 1
      %s53 = scalar_select %p50, %s51, %s52
      %p56 = pneg %p50
      %p57 = scmp.eq.s32.totalorder %s15, 1
      %p58 = por %p56, %p57
      %p59 = scmp.ne.s32.totalorder %s51, %s54
      %p60 = scmp.eq.s32.totalorder %s15, 0
      %p61 = por %p59, %p60
      %p62 = scmp.ne.s32.totalorder %s51, %s54
      %p63 = scmp.eq.s32.totalorder %s20, 1
      %p64 = por %p62, %p63
      %p65 = scmp.ne.s32.totalorder %s54, %s55
      %p66 = scmp.eq.s32.totalorder %s20, 0
      %p67 = por %p65, %p66
      %p68 = scmp.ne.s32.totalorder %s54, %s55
      %p69 = scmp.eq.s32.totalorder %s21, 1
      %p70 = por %p68, %p69
      %p72 = scmp.ne.s32.totalorder %s55, %s71
      %p73 = scmp.eq.s32.totalorder %s21, 0
      %p74 = por %p72, %p73
      %s76 = sadd.s32 %s75, 1
      %p79 = scmp.eq.s32.totalorder %s15, 1
      %p80 = scmp.ne.s32.totalorder %s75, %s77
      %p81 = scmp.eq.s32.totalorder %s15, 0
      %p82 = por %p80, %p81
      %p83 = scmp.ne.s32.totalorder %s75, %s77
      %p84 = scmp.eq.s32.totalorder %s20, 1
      %p85 = por %p83, %p84
      %p86 = scmp.ne.s32.totalorder %s77, %s78
      %p87 = scmp.eq.s32.totalorder %s20, 0
      %p88 = por %p86, %p87
      %p89 = scmp.ne.s32.totalorder %s77, %s78
      %p90 = scmp.eq.s32.totalorder %s21, 1
      %p91 = por %p89, %p90
      %p93 = scmp.ne.s32.totalorder %s78, %s92
      %p94 = scmp.eq.s32.totalorder %s21, 0
      %p95 = por %p93, %p94
      %s97 = sadd.s32 %s96, 1
      %p100 = scmp.eq.s32.totalorder %s15, 1
      %p101 = scmp.ne.s32.totalorder %s96, %s98
      %p102 = scmp.eq.s32.totalorder %s15, 0
      %p103 = por %p101, %p102
      %p104 = scmp.ne.s32.totalorder %s96, %s98
      %p105 = scmp.eq.s32.totalorder %s20, 1
      %p106 = por %p104, %p105
      %p107 = scmp.ne.s32.totalorder %s98, %s99
      %p108 = scmp.eq.s32.totalorder %s20, 0
      %p109 = por %p107, %p108
      %p110 = scmp.ne.s32.totalorder %s98, %s99
      %p111 = scmp.eq.s32.totalorder %s21, 1
      %p112 = por %p110, %p111
      %p114 = scmp.ne.s32.totalorder %s99, %s113
      %p115 = scmp.eq.s32.totalorder %s21, 0
      %p116 = por %p114, %p115
      %s118 = sadd.s32 %s117, 1
      %p121 = scmp.eq.s32.totalorder %s15, 1
      %p122 = scmp.ne.s32.totalorder %s117, %s119
      %p123 = scmp.eq.s32.totalorder %s15, 0
      %p124 = por %p122, %p123
      %p125 = scmp.ne.s32.totalorder %s117, %s119
      %p126 = scmp.eq.s32.totalorder %s20, 1
      %p127 = por %p125, %p126
      %p128 = scmp.ne.s32.totalorder %s119, %s120
      %p129 = scmp.eq.s32.totalorder %s20, 0
      %p130 = por %p128, %p129
      %p131 = scmp.ne.s32.totalorder %s119, %s120
      %p132 = scmp.eq.s32.totalorder %s21, 1
      %p133 = por %p131, %p132
      %p135 = scmp.ne.s32.totalorder %s120, %s134
      %p136 = scmp.eq.s32.totalorder %s21, 0
      %p137 = por %p135, %p136
      %s139 = sadd.s32 %s138, 1
      %p142 = scmp.eq.s32.totalorder %s15, 1
      %p143 = scmp.ne.s32.totalorder %s138, %s140
      %p144 = scmp.eq.s32.totalorder %s15, 0
      %p145 = por %p143, %p144
      %p146 = scmp.ne.s32.totalorder %s138, %s140
      %p147 = scmp.eq.s32.totalorder %s20, 1
      %p148 = por %p146, %p147
      %p149 = scmp.ne.s32.totalorder %s140, %s141
      %p150 = scmp.eq.s32.totalorder %s20, 0
      %p151 = por %p149, %p150
      %p152 = scmp.ne.s32.totalorder %s140, %s141
      %p153 = scmp.eq.s32.totalorder %s21, 1
      %p154 = por %p152, %p153
      %p156 = scmp.ne.s32.totalorder %s141, %s155
      %p157 = scmp.eq.s32.totalorder %s21, 0
      %p158 = por %p156, %p157
      %s159 = ssub.s32 %s15, %s22
      %p160 = scmp.eq.s32.totalorder %s159, 0
      %s162 = sadd.s32 %s161, 1
      %s163 = scalar_select %p160, %s161, %s162
      %p166 = pneg %p160
      %p167 = scmp.eq.s32.totalorder %s15, 1
      %p168 = por %p166, %p167
      %p169 = scmp.ne.s32.totalorder %s161, %s164
      %p170 = scmp.eq.s32.totalorder %s15, 0
      %p171 = por %p169, %p170
      %p172 = scmp.ne.s32.totalorder %s161, %s164
      %p173 = scmp.eq.s32.totalorder %s20, 1
      %p174 = por %p172, %p173
      %p175 = scmp.ne.s32.totalorder %s164, %s165
      %p176 = scmp.eq.s32.totalorder %s20, 0
      %p177 = por %p175, %p176
      %p178 = scmp.ne.s32.totalorder %s164, %s165
      %p179 = scmp.eq.s32.totalorder %s21, 1
      %p180 = por %p178, %p179
      %p182 = scmp.ne.s32.totalorder %s165, %s181
      %p183 = scmp.eq.s32.totalorder %s21, 0
      %p184 = por %p182, %p183
      %p185 = scmp.le.s32.totalorder 1, %s15
      %p186 = scmp.lt.s32.totalorder %s15, 3
      %p187 = pnand %p185, %p186
      %p188 = pneg %p187
      // Predicated region
      $region9: #{tpu_custom_call.1} parent=5 // pred_check
        _
      $region10: #{tpu_custom_call.1} parent=5 // pred_check_branch
        %190 = sbr.rel (%p187) target = $region12
      $region11: #{tpu_custom_call.1} parent=5 // pred_region
        %s191 = ssub.s32 %s15, 1
        // Predicated region
        $region13: #{tpu_custom_call.1} parent=11 // pred_check
          %p192 = pneg %p88
        $region14: #{tpu_custom_call.1} parent=11 // pred_check_branch
          %194 = sbr.rel (%p192) target = $region16
        $region15: #{tpu_custom_call.1} parent=11 // pred_region
          _
        $region16: #{tpu_custom_call.1} parent=11 // pred_fallthru
          _
        // Predicated region
        $region17: #{tpu_custom_call.1} parent=11 // pred_check
          %p195 = pneg %p109
        $region18: #{tpu_custom_call.1} parent=11 // pred_check_branch
          %197 = sbr.rel (%p195) target = $region20
        $region19: #{tpu_custom_call.1} parent=11 // pred_region
          _
        $region20: #{tpu_custom_call.1} parent=11 // pred_fallthru
          _
        // Predicated region
        $region21: #{tpu_custom_call.1} parent=11 // pred_check
          %p198 = pneg %p130
        $region22: #{tpu_custom_call.1} parent=11 // pred_check_branch
          %200 = sbr.rel (%p198) target = $region24
        $region23: #{tpu_custom_call.1} parent=11 // pred_region
          _
        $region24: #{tpu_custom_call.1} parent=11 // pred_fallthru
          _
        // Predicated region
        $region25: #{tpu_custom_call.1} parent=11 // pred_check
          %p201 = pneg %p151
        $region26: #{tpu_custom_call.1} parent=11 // pred_check_branch
          %203 = sbr.rel (%p201) target = $region28
        $region27: #{tpu_custom_call.1} parent=11 // pred_region
          _
        $region28: #{tpu_custom_call.1} parent=11 // pred_fallthru
          _
      $region12: #{tpu_custom_call.1} parent=5 // pred_fallthru
        _
      %p204 = scmp.lt.s32.totalorder %s15, 2
      // Predicated region
      $region29: #{tpu_custom_call.1} parent=5 // pred_check
        %p205 = pneg %p204
      $region30: #{tpu_custom_call.1} parent=5 // pred_check_branch
        %207 = sbr.rel (%p205) target = $region32
      $region31: #{tpu_custom_call.1} parent=5 // pred_region
        // Predicated region
        $region33: #{tpu_custom_call.1} parent=31 // pred_check
          %p208 = pneg %p35
        $region34: #{tpu_custom_call.1} parent=31 // pred_check_branch
          %210 = sbr.rel (%p208) target = $region36
        $region35: #{tpu_custom_call.1} parent=31 // pred_region
          %p211 = scmp.lt.s32.totalorder %s15, 1
          %s212 = scalar_select %p211, %s15, 1
          %s213 = smul.addr %s212, 4
          %s214 = scalar_lea.vmem %s0, %s213
        $region36: #{tpu_custom_call.1} parent=31 // pred_fallthru
          _
        // Predicated region
        $region37: #{tpu_custom_call.1} parent=31 // pred_check
          %p215 = pneg %p61
        $region38: #{tpu_custom_call.1} parent=31 // pred_check_branch
          %217 = sbr.rel (%p215) target = $region40
        $region39: #{tpu_custom_call.1} parent=31 // pred_region
          %p218 = scmp.lt.s32.totalorder %s15, 1
          %s219 = scalar_select %p218, %s15, 1
          %s220 = smul.addr %s219, 8
          %s221 = scalar_lea.vmem %s1, %s220
        $region40: #{tpu_custom_call.1} parent=31 // pred_fallthru
          _
      $region32: #{tpu_custom_call.1} parent=5 // pred_fallthru
        _
      %p222 = scmp.le.s32.totalorder 1, %s15
      %p223 = scmp.lt.s32.totalorder %s15, 3
      %p224 = pnand %p222, %p223
      %p225 = pneg %p224
      // Predicated region
      $region41: #{tpu_custom_call.1} parent=5 // pred_check
        _
      $region42: #{tpu_custom_call.1} parent=5 // pred_check_branch
        %227 = sbr.rel (%p224) target = $region44
      $region43: #{tpu_custom_call.1} parent=5 // pred_region
        %s228 = ssub.s32 %s15, 1
        %p229 = scmp.lt.s32.totalorder %s20, 1
        %s230 = scalar_select %p229, %s20, 1
        %s231 = smul.addr %s230, 4
        %s232 = scalar_lea.vmem %s0, %s231
        %p233 = pneg %p41
        %p234 = pneg %p38
        %p235 = scmp.lt.s32.totalorder %s20, 1
        %s236 = scalar_select %p235, %s20, 1
        %s237 = smul.addr %s236, 8
        %s238 = scalar_lea.vmem %s1, %s237
        %p239 = pneg %p67
        %p240 = pneg %p64
        %p241 = pneg %p88
        %p242 = pneg %p85
        %p243 = pneg %p109
        %p244 = pneg %p106
        %p245 = pneg %p130
        %p246 = pneg %p127
        %p247 = pneg %p151
        %p248 = pneg %p148
        %p249 = pneg %p177
        %p250 = pneg %p174
        %s251 = sand.u32 %s164, 1
        %s252 = scalar_lea.sflag [#allocation3], %s251
        %s253 = sand.u32 %s164, 1
        %s254 = smul.addr %s253, 8
        %s255 = scalar_lea.vmem [#allocation2], %s254
        %p256 = scmp.lt.s32.totalorder %s20, 1
        %s257 = scalar_select %p256, %s20, 1
        %s258 = smul.addr %s257, 4
        %s259 = scalar_lea.vmem %s0, %s258
        %p260 = scmp.lt.s32.totalorder %s20, 1
        %s261 = scalar_select %p260, %s20, 1
        %s262 = smul.addr %s261, 8
        %s263 = scalar_lea.vmem %s1, %s262
        %v265 = vld [vmem:[%s263] sm:$0xff]
        %v266 = vld [vmem:[%s259] sm:$0xf]
        %v267 = vld [vmem:[%s5] sm:$0x3]
        %v268 = vlaneseq
        %v269 = vand.u32 %v268, 127
        %270 = vset.pattern.permute.xlu0 2
        %271 = vperm.xlu0 %270, %v265
        %v272 = vpop.permute.xlu0 %271
        %vm273 = vcmp.eq.s32.totalorder %v269, %v272
        %v274 = vsel %vm273, 1, 0
        %v275 = vcvt.s32.f32 %v274
        %v276 = vld [vmem:[%s4] sm:$0x3]
        %vm277 = vcmask 15360
        %v279 = vsel %vm277, %v275, 0
        %vm281 = vcmask 1041408
        %v283 = vsel %vm281, %v276, 0
        %285 = vmatprep.subr.mxu0 0.0
        %286 = vmatpush1.msra.mxu0 0.0
        %287 = vmatprep.subr.mxu0 0.0
        %288 = vmatpush1.msra.mxu0 0.0
        %289 = vmatprep.subr.mxu0 0.0
        %290 = vmatpush1.msra.mxu0 0.0
        %291 = vmatprep.subr.mxu0 0.0
        %292 = vmatpush1.msra.mxu0 0.0
        %293 = vmatprep.subr.mxu0 0.0
        %294 = vmatpush1.msra.mxu0 0.0
        %295 = vmatprep.subr.mxu0 0.0
        %296 = vmatpush1.msra.mxu0 0.0
        %297 = vmatprep.subr.mxu0 0.0
        %298 = vmatpush1.msra.mxu0 0.0
        %299 = vmatprep.subr.mxu0 0.0
        %300 = vmatpush1.msra.mxu0 0.0
        %301 = vmatprep.subr.mxu0 0.0
        %302 = vmatpush1.msra.mxu0 0.0
        %303 = vmatprep.subr.mxu0 0.0
        %304 = vmatpush1.msra.mxu0 0.0
        %305 = vmatprep.subr.mxu0 0.0
        %306 = vmatpush1.msra.mxu0 0.0
        %307 = vmatprep.subr.mxu0 0.0
        %308 = vmatpush1.msra.mxu0 0.0
        %309 = vmatprep.subr.mxu0 0.0
        %310 = vmatpush1.msra.mxu0 0.0
        %311 = vmatprep.subr.mxu0 0.0
        %312 = vmatpush1.msra.mxu0 0.0
        %313 = vmatprep.subr.mxu0 0.0
        %314 = vmatpush1.msra.mxu0 0.0
        %315 = vmatprep.subr.mxu0 0.0
        %316 = vmatpush1.msra.mxu0 %v283
        %317 = vmatprep.subr.mxu0 0.0
        %318 = vmatpush2.msra.mxu0 0.0
        %319 = vmatprep.subr.mxu0 0.0
        %320 = vmatpush2.msra.mxu0 0.0
        %321 = vmatprep.subr.mxu0 0.0
        %322 = vmatpush2.msra.mxu0 0.0
        %323 = vmatprep.subr.mxu0 0.0
        %324 = vmatpush2.msra.mxu0 0.0
        %325 = vmatprep.subr.mxu0 0.0
        %326 = vmatpush2.msra.mxu0 0.0
        %327 = vmatprep.subr.mxu0 0.0
        %328 = vmatpush2.msra.mxu0 0.0
        %329 = vmatprep.subr.mxu0 0.0
        %330 = vmatpush2.msra.mxu0 0.0
        %331 = vmatprep.subr.mxu0 0.0
        %332 = vmatpush2.msra.mxu0 0.0
        %333 = vmatprep.subr.mxu0 0.0
        %334 = vmatpush2.msra.mxu0 0.0
        %335 = vmatprep.subr.mxu0 0.0
        %336 = vmatpush2.msra.mxu0 0.0
        %337 = vmatprep.subr.mxu0 0.0
        %338 = vmatpush2.msra.mxu0 0.0
        %339 = vmatprep.subr.mxu0 0.0
        %340 = vmatpush2.msra.mxu0 0.0
        %341 = vmatprep.subr.mxu0 0.0
        %342 = vmatpush2.msra.mxu0 0.0
        %343 = vmatprep.subr.mxu0 0.0
        %344 = vmatpush2.msra.mxu0 0.0
        %345 = vmatprep.subr.mxu0 0.0
        %346 = vmatpush2.msra.mxu0 0.0
        %347 = vmatprep.subr.mxu0 0.0
        %348 = vmatpush2.msra.mxu0 0.0
        %349 = vmatprep.mubr.f32.mxu0 0.0
        %350 = vmatmul.mubr.f32.gmra.mxu0 %v279
        %v351 = vpop.f32.mrf.mxu0
        %v352 = vadd.f32 0.0, %v351
        %v353 = vpop.f32.mrf.mxu0
        %354 = vdwg.mxu0
        %vm355 = vcmask 31744
        %v357 = vsel %vm355, %v266, 0
        %v360 = vsel %vm281, %v267, 0
        %362 = vmatprep.subr.bf16.mxu0 0
        %363 = vmatpush1.bf16.msra.mxu0 0
        %364 = vmatprep.subr.bf16.mxu0 0
        %365 = vmatpush1.bf16.msra.mxu0 0
        %366 = vmatprep.subr.bf16.mxu0 0
        %367 = vmatpush1.bf16.msra.mxu0 0
        %368 = vmatprep.subr.bf16.mxu0 0
        %369 = vmatpush1.bf16.msra.mxu0 0
        %370 = vmatprep.subr.bf16.mxu0 0
        %371 = vmatpush1.bf16.msra.mxu0 0
        %372 = vmatprep.subr.bf16.mxu0 0
        %373 = vmatpush1.bf16.msra.mxu0 0
        %374 = vmatprep.subr.bf16.mxu0 0
        %375 = vmatpush1.bf16.msra.mxu0 0
        %376 = vmatprep.subr.bf16.mxu0 0
        %377 = vmatpush1.bf16.msra.mxu0 %v360
        %378 = vmatprep.subr.bf16.mxu0 0
        %379 = vmatpush2.bf16.msra.mxu0 0
        %380 = vmatprep.subr.bf16.mxu0 0
        %381 = vmatpush2.bf16.msra.mxu0 0
        %382 = vmatprep.subr.bf16.mxu0 0
        %383 = vmatpush2.bf16.msra.mxu0 0
        %384 = vmatprep.subr.bf16.mxu0 0
        %385 = vmatpush2.bf16.msra.mxu0 0
        %386 = vmatprep.subr.bf16.mxu0 0
        %387 = vmatpush2.bf16.msra.mxu0 0
        %388 = vmatprep.subr.bf16.mxu0 0
        %389 = vmatpush2.bf16.msra.mxu0 0
        %390 = vmatprep.subr.bf16.mxu0 0
        %391 = vmatpush2.bf16.msra.mxu0 0
        %392 = vmatprep.subr.bf16.mxu0 0
        %393 = vmatpush2.bf16.msra.mxu0 0
        %394 = vmatprep.mubr.bf16.mxu0 0
        %395 = vmatmul.mubr.bf16.gmra.mxu0 %v357
        %v396 = vpop.f32.mrf.mxu0
        %v397 = vadd.f32 %v352, %v396
        %v398 = vpop.f32.mrf.mxu0
        %v399 = vpop.f32.mrf.mxu0
        %v400 = vpop.f32.mrf.mxu0
        %401 = vdwg.mxu0
        %402 = vset.pattern.permute.xlu0 0
        %403 = vperm.xlu0 %402, %v265
        %v404 = vpop.permute.xlu0 %403
        %vm405 = vcmp.eq.s32.totalorder %v269, %v404
        %v406 = vsel %vm405, 1, 0
        %v407 = vcvt.s32.f32 %v406
        %v408 = vpack.c.bf16 %v407, %v407
        %409 = vset.pattern.permute.xlu0 1
        %410 = vperm.xlu0 %409, %v265
        %v411 = vpop.permute.xlu0 %410
        %vm412 = vcmp.eq.s32.totalorder %v269, %v411
        %v413 = vsel %vm412, 1, 0
        %v414 = vcvt.s32.f32 %v413
        %v415 = vpack.c.bf16 %v414, %v414
        %v416 = vld [vmem:[%s2] sm:$0xf]
        %v417 = vld [vmem:[%s2 + $0x4] sm:$0xf]
        %v418 = vld [vmem:[%s2 + $0x8] sm:$0xf]
        %v422 = vunpack.c.l.b16 %v416
        %v423 = vunpack.c.l.b16 %v417
        %v424 = vunpack.c.l.b16 %v418
        %v425 = vpack.c.b16 %v423, %v422
        %v426 = vpack.c.b16 %v424, %v424
        %vm428 = vcmask 195584
        %v430 = vsel %vm428, %v408, 0
        %vm432 = vcmask 1043456
        %v434 = vsel %vm432, %v426, 0
        %436 = vmatprep.subr.bf16.mxu0 0
        %437 = vmatpush1.bf16.msra.mxu0 0
        %438 = vmatprep.subr.bf16.mxu0 0
        %439 = vmatpush1.bf16.msra.mxu0 0
        %440 = vmatprep.subr.bf16.mxu0 0
        %441 = vmatpush1.bf16.msra.mxu0 0
        %442 = vmatprep.subr.bf16.mxu0 0
        %443 = vmatpush1.bf16.msra.mxu0 0
        %444 = vmatprep.subr.bf16.mxu0 0
        %445 = vmatpush1.bf16.msra.mxu0 0
        %446 = vmatprep.subr.bf16.mxu0 0
        %447 = vmatpush1.bf16.msra.mxu0 0
        %448 = vmatprep.subr.bf16.mxu0 0
        %449 = vmatpush1.bf16.msra.mxu0 %v434
        %450 = vmatprep.subr.bf16.mxu0 0
        %451 = vmatpush1.bf16.msra.mxu0 %v425
        %452 = vmatprep.subr.bf16.mxu0 0
        %453 = vmatpush2.bf16.msra.mxu0 0
        %454 = vmatprep.subr.bf16.mxu0 0
        %455 = vmatpush2.bf16.msra.mxu0 0
        %456 = vmatprep.subr.bf16.mxu0 0
        %457 = vmatpush2.bf16.msra.mxu0 0
        %458 = vmatprep.subr.bf16.mxu0 0
        %459 = vmatpush2.bf16.msra.mxu0 0
        %460 = vmatprep.subr.bf16.mxu0 0
        %461 = vmatpush2.bf16.msra.mxu0 0
        %462 = vmatprep.subr.bf16.mxu0 0
        %463 = vmatpush2.bf16.msra.mxu0 0
        %464 = vmatprep.subr.bf16.mxu0 0
        %465 = vmatpush2.bf16.msra.mxu0 0
        %466 = vmatprep.subr.bf16.mxu0 0
        %467 = vmatpush2.bf16.msra.mxu0 0
        %468 = vmatprep.mubr.bf16.mxu0 0
        %469 = vmatmul.mubr.bf16.gmra.mxu0 %v430
        %v470 = vpop.f32.mrf.mxu0
        %v471 = vadd.f32 0.0, %v470
        %v472 = vpop.f32.mrf.mxu0
        %v473 = vpop.f32.mrf.mxu0
        %v474 = vpop.f32.mrf.mxu0
        %475 = vdwg.mxu0
        %v476 = vadd.f32 %v397, %v471
        %v477 = vld [vmem:[%s3] sm:$0xf]
        %v478 = vld [vmem:[%s3 + $0x4] sm:$0xf]
        %v479 = vld [vmem:[%s3 + $0x8] sm:$0xf]
        %v483 = vunpack.c.l.b16 %v477
        %v484 = vunpack.c.l.b16 %v478
        %v485 = vunpack.c.l.b16 %v479
        %v486 = vpack.c.b16 %v484, %v483
        %v487 = vpack.c.b16 %v485, %v485
        %v490 = vsel %vm428, %v415, 0
        %v493 = vsel %vm432, %v487, 0
        %495 = vmatprep.subr.bf16.mxu0 0
        %496 = vmatpush1.bf16.msra.mxu0 0
        %497 = vmatprep.subr.bf16.mxu0 0
        %498 = vmatpush1.bf16.msra.mxu0 0
        %499 = vmatprep.subr.bf16.mxu0 0
        %500 = vmatpush1.bf16.msra.mxu0 0
        %501 = vmatprep.subr.bf16.mxu0 0
        %502 = vmatpush1.bf16.msra.mxu0 0
        %503 = vmatprep.subr.bf16.mxu0 0
        %504 = vmatpush1.bf16.msra.mxu0 0
        %505 = vmatprep.subr.bf16.mxu0 0
        %506 = vmatpush1.bf16.msra.mxu0 0
        %507 = vmatprep.subr.bf16.mxu0 0
        %508 = vmatpush1.bf16.msra.mxu0 %v493
        %509 = vmatprep.subr.bf16.mxu0 0
        %510 = vmatpush1.bf16.msra.mxu0 %v486
        %511 = vmatprep.subr.bf16.mxu0 0
        %512 = vmatpush2.bf16.msra.mxu0 0
        %513 = vmatprep.subr.bf16.mxu0 0
        %514 = vmatpush2.bf16.msra.mxu0 0
        %515 = vmatprep.subr.bf16.mxu0 0
        %516 = vmatpush2.bf16.msra.mxu0 0
        %517 = vmatprep.subr.bf16.mxu0 0
        %518 = vmatpush2.bf16.msra.mxu0 0
        %519 = vmatprep.subr.bf16.mxu0 0
        %520 = vmatpush2.bf16.msra.mxu0 0
        %521 = vmatprep.subr.bf16.mxu0 0
        %522 = vmatpush2.bf16.msra.mxu0 0
        %523 = vmatprep.subr.bf16.mxu0 0
        %524 = vmatpush2.bf16.msra.mxu0 0
        %525 = vmatprep.subr.bf16.mxu0 0
        %526 = vmatpush2.bf16.msra.mxu0 0
        %527 = vmatprep.mubr.bf16.mxu0 0
        %528 = vmatmul.mubr.bf16.gmra.mxu0 %v490
        %v529 = vpop.f32.mrf.mxu0
        %v530 = vadd.f32 0.0, %v529
        %v531 = vpop.f32.mrf.mxu0
        %v532 = vpop.f32.mrf.mxu0
        %v533 = vpop.f32.mrf.mxu0
        %534 = vdwg.mxu0
        %v535 = vadd.f32 %v476, %v530
        %v536 = vmax.f32 %v535, 0.0
        %537 = vst [vmem:[%s255] sm:$0xff] %v536
        %s538 = sand.u32 %s164, 1
        %s539 = scalar_lea.sflag [#allocation3], %s538
        %s540 = sand.u32 %s164, 1
        %s541 = smul.addr %s540, 8
        %s542 = scalar_lea.vmem [#allocation2], %s541
        // Predicated region
        $region45: #{tpu_custom_call.1} parent=43 // pred_check
          %p543 = pneg %p174
        $region46: #{tpu_custom_call.1} parent=43 // pred_check_branch
          %545 = sbr.rel (%p543) target = $region48
        $region47: #{tpu_custom_call.1} parent=43 // pred_region
          %s547 = ssub.s32 128, 128
          %548 = vsyncadd %s539, %s547
          %s549 = smul.addr %s20, 128
          %s550 = scalar_lea.hbm %s6, %s549
          %s552 = sshll.u32 %s542, 4
          %s553 = int_to_ptr.vmem [resolvable:$true] %s552
          %555 = dma.vmem_to_hbm [thread:$0]  %s553, 128, %s550, %s539
        $region48: #{tpu_custom_call.1} parent=43 // pred_fallthru
          _
      $region44: #{tpu_custom_call.1} parent=5 // pred_fallthru
        _
      %p556 = scmp.le.s32.totalorder 2, %s15
      // Predicated region
      $region49: #{tpu_custom_call.1} parent=5 // pred_check
        %p557 = pneg %p556
      $region50: #{tpu_custom_call.1} parent=5 // pred_check_branch
        %559 = sbr.rel (%p557) target = $region52
      $region51: #{tpu_custom_call.1} parent=5 // pred_region
        %s560 = ssub.s32 %s15, 2
        // Predicated region
        $region53: #{tpu_custom_call.1} parent=51 // pred_check
          %p561 = pneg %p180
        $region54: #{tpu_custom_call.1} parent=51 // pred_check_branch
          %563 = sbr.rel (%p561) target = $region56
        $region55: #{tpu_custom_call.1} parent=51 // pred_region
          %s564 = sand.u32 %s165, 1
          %s565 = scalar_lea.sflag [#allocation3], %s564
          %s566 = sand.u32 %s165, 1
          %s567 = smul.addr %s566, 8
          %s568 = scalar_lea.vmem [#allocation2], %s567
          %569 = dma.done %s565, 128
        $region56: #{tpu_custom_call.1} parent=51 // pred_fallthru
          _
      $region52: #{tpu_custom_call.1} parent=5 // pred_fallthru
        _
    $region6: #{tpu_custom_call.1} parent=1 // loop_footer
      %s19 = sadd.s32 1, %s15
    $region7: #{tpu_custom_call.1} parent=1 // loop_footer_branch
      %14 = sbr.rel target = $region3
    $region8: #{tpu_custom_call.1} parent=1 // loop_exit
      _
    %570 = vsyncpa [#allocation3], 1
    %s571 = scalar_lea.sflag [#allocation3], 1
    %572 = vsyncpa %s571, 1

// kernel: tpu_custom_call.1
$region0: #{tpu_custom_call.1}
  #allocation0 [shape = 'u32[]', space=smem, size = 0x4, offset = 0x4, fixed_abs, tag = 'smem constant byte address 0x4 - core index']
  #allocation1 [shape = 'u32[144,128]{1,0:T(1,128)}', space=vmem, size = 0x12000, scoped, tag = 'internal scratch']
  %s0 = inlined_call_operand.vmem [shape: bf16[16,4], index: 0, kind: input, shape index: {}]
  %s1 = inlined_call_operand.vmem [shape: s32[16,8], index: 1, kind: input, shape index: {}]
  %s2 = inlined_call_operand.vmem [shape: bf16[24,128], index: 2, kind: input, shape index: {}]
  %s3 = inlined_call_operand.vmem [shape: bf16[24,128], index: 3, kind: input, shape index: {}]
  %s4 = inlined_call_operand.vmem [shape: f32[2,128], index: 4, kind: input, shape index: {}]
  %s5 = inlined_call_operand.vmem [shape: bf16[4,128], index: 5, kind: input, shape index: {}]
  %s6 = inlined_call_operand.hbm [shape: f32[16,128], index: 6, kind: output, shape index: {}]
  %s7 = sld [smem:[#allocation0]]
  $region57: #{tpu_custom_call.1} parent=0
    _
  %s9 = ssub.s32 1, %s7
  %s10 = scalar_select 0, %s9, %s7
  $region1: #{tpu_custom_call.1} parent=0
    #allocation2 [shape = 'u8[8192]{0}', space=vmem, size = 0x2000, scoped, tag = 'output window, operand 0']
    #allocation3 [shape = 's32[2]{0}', space=sflag, size = 0x8, scoped, tag = 'scoped memory for tpu_custom_call.1']
    %11 = vsyncpa [#allocation3], 0
    %s12 = scalar_lea.sflag [#allocation3], 1
    %13 = vsyncpa %s12, 0
    loop: start=0, step=1, limit=4
    $region2: #{tpu_custom_call.1} parent=1 // loop_pre_header
      _
    $region3: #{tpu_custom_call.1} parent=1 // loop_header
      %s15 = sphi 0, %s19
      %p16 = scmp.ge.s32.totalorder %s15, 4
      %s25 = sphi 0, %s27
      %s28 = sphi 0, %s25
      %s29 = sphi 0, %s28
      %s45 = sphi 0, %s29
      %s51 = sphi 0, %s53
      %s54 = sphi 0, %s51
      %s55 = sphi 0, %s54
      %s71 = sphi 0, %s55
      %s75 = sphi 0, %s75
      %s77 = sphi 0, %s75
      %s78 = sphi 0, %s77
      %s92 = sphi 0, %s78
      %s96 = sphi 0, %s96
      %s98 = sphi 0, %s96
      %s99 = sphi 0, %s98
      %s113 = sphi 0, %s99
      %s117 = sphi 0, %s117
      %s119 = sphi 0, %s117
      %s120 = sphi 0, %s119
      %s134 = sphi 0, %s120
      %s138 = sphi 0, %s138
      %s140 = sphi 0, %s138
      %s141 = sphi 0, %s140
      %s155 = sphi 0, %s141
      %s161 = sphi 0, %s163
      %s164 = sphi 0, %s161
      %s165 = sphi 0, %s164
      %s181 = sphi 0, %s165
    $region4: #{tpu_custom_call.1} parent=1 // loop_header_branch
      %18 = sbr.rel (%p16) target = $region8
    $region5: #{tpu_custom_call.1} parent=1 // loop_body
      %s20 = ssub.s32 %s15, 1
      %s21 = ssub.s32 %s15, 2
      %s22 = sadd.s32 %s15, 1
      %s23 = ssub.s32 %s15, %s22
      %p24 = scmp.eq.s32.totalorder %s23, 0
      %s26 = sadd.s32 %s25, 1
      %s27 = scalar_select %p24, %s25, %s26
      %p30 = pneg %p24
      %p31 = scmp.eq.s32.totalorder %s15, 1
      %p32 = por %p30, %p31
      %p33 = scmp.ne.s32.totalorder %s25, %s28
      %p34 = scmp.eq.s32.totalorder %s15, 0
      %p35 = por %p33, %p34
      %p36 = scmp.ne.s32.totalorder %s25, %s28
      %p37 = scmp.eq.s32.totalorder %s20, 1
      %p38 = por %p36, %p37
      %p39 = scmp.ne.s32.totalorder %s28, %s29
      %p40 = scmp.eq.s32.totalorder %s20, 0
      %p41 = por %p39, %p40
      %p42 = scmp.ne.s32.totalorder %s28, %s29
      %p43 = scmp.eq.s32.totalorder %s21, 1
      %p44 = por %p42, %p43
      %p46 = scmp.ne.s32.totalorder %s29, %s45
      %p47 = scmp.eq.s32.totalorder %s21, 0
      %p48 = por %p46, %p47
      %s49 = ssub.s32 %s15, %s22
      %p50 = scmp.eq.s32.totalorder %s49, 0
      %s52 = sadd.s32 %s51, 1
      %s53 = scalar_select %p50, %s51, %s52
      %p56 = pneg %p50
      %p57 = scmp.eq.s32.totalorder %s15, 1
      %p58 = por %p56, %p57
      %p59 = scmp.ne.s32.totalorder %s51, %s54
      %p60 = scmp.eq.s32.totalorder %s15, 0
      %p61 = por %p59, %p60
      %p62 = scmp.ne.s32.totalorder %s51, %s54
      %p63 = scmp.eq.s32.totalorder %s20, 1
      %p64 = por %p62, %p63
      %p65 = scmp.ne.s32.totalorder %s54, %s55
      %p66 = scmp.eq.s32.totalorder %s20, 0
      %p67 = por %p65, %p66
      %p68 = scmp.ne.s32.totalorder %s54, %s55
      %p69 = scmp.eq.s32.totalorder %s21, 1
      %p70 = por %p68, %p69
      %p72 = scmp.ne.s32.totalorder %s55, %s71
      %p73 = scmp.eq.s32.totalorder %s21, 0
      %p74 = por %p72, %p73
      %s76 = sadd.s32 %s75, 1
      %p79 = scmp.eq.s32.totalorder %s15, 1
      %p80 = scmp.ne.s32.totalorder %s75, %s77
      %p81 = scmp.eq.s32.totalorder %s15, 0
      %p82 = por %p80, %p81
      %p83 = scmp.ne.s32.totalorder %s75, %s77
      %p84 = scmp.eq.s32.totalorder %s20, 1
      %p85 = por %p83, %p84
      %p86 = scmp.ne.s32.totalorder %s77, %s78
      %p87 = scmp.eq.s32.totalorder %s20, 0
      %p88 = por %p86, %p87
      %p89 = scmp.ne.s32.totalorder %s77, %s78
      %p90 = scmp.eq.s32.totalorder %s21, 1
      %p91 = por %p89, %p90
      %p93 = scmp.ne.s32.totalorder %s78, %s92
      %p94 = scmp.eq.s32.totalorder %s21, 0
      %p95 = por %p93, %p94
      %s97 = sadd.s32 %s96, 1
      %p100 = scmp.eq.s32.totalorder %s15, 1
      %p101 = scmp.ne.s32.totalorder %s96, %s98
      %p102 = scmp.eq.s32.totalorder %s15, 0
      %p103 = por %p101, %p102
      %p104 = scmp.ne.s32.totalorder %s96, %s98
      %p105 = scmp.eq.s32.totalorder %s20, 1
      %p106 = por %p104, %p105
      %p107 = scmp.ne.s32.totalorder %s98, %s99
      %p108 = scmp.eq.s32.totalorder %s20, 0
      %p109 = por %p107, %p108
      %p110 = scmp.ne.s32.totalorder %s98, %s99
      %p111 = scmp.eq.s32.totalorder %s21, 1
      %p112 = por %p110, %p111
      %p114 = scmp.ne.s32.totalorder %s99, %s113
      %p115 = scmp.eq.s32.totalorder %s21, 0
      %p116 = por %p114, %p115
      %s118 = sadd.s32 %s117, 1
      %p121 = scmp.eq.s32.totalorder %s15, 1
      %p122 = scmp.ne.s32.totalorder %s117, %s119
      %p123 = scmp.eq.s32.totalorder %s15, 0
      %p124 = por %p122, %p123
      %p125 = scmp.ne.s32.totalorder %s117, %s119
      %p126 = scmp.eq.s32.totalorder %s20, 1
      %p127 = por %p125, %p126
      %p128 = scmp.ne.s32.totalorder %s119, %s120
      %p129 = scmp.eq.s32.totalorder %s20, 0
      %p130 = por %p128, %p129
      %p131 = scmp.ne.s32.totalorder %s119, %s120
      %p132 = scmp.eq.s32.totalorder %s21, 1
      %p133 = por %p131, %p132
      %p135 = scmp.ne.s32.totalorder %s120, %s134
      %p136 = scmp.eq.s32.totalorder %s21, 0
      %p137 = por %p135, %p136
      %s139 = sadd.s32 %s138, 1
      %p142 = scmp.eq.s32.totalorder %s15, 1
      %p143 = scmp.ne.s32.totalorder %s138, %s140
      %p144 = scmp.eq.s32.totalorder %s15, 0
      %p145 = por %p143, %p144
      %p146 = scmp.ne.s32.totalorder %s138, %s140
      %p147 = scmp.eq.s32.totalorder %s20, 1
      %p148 = por %p146, %p147
      %p149 = scmp.ne.s32.totalorder %s140, %s141
      %p150 = scmp.eq.s32.totalorder %s20, 0
      %p151 = por %p149, %p150
      %p152 = scmp.ne.s32.totalorder %s140, %s141
      %p153 = scmp.eq.s32.totalorder %s21, 1
      %p154 = por %p152, %p153
      %p156 = scmp.ne.s32.totalorder %s141, %s155
      %p157 = scmp.eq.s32.totalorder %s21, 0
      %p158 = por %p156, %p157
      %s159 = ssub.s32 %s15, %s22
      %p160 = scmp.eq.s32.totalorder %s159, 0
      %s162 = sadd.s32 %s161, 1
      %s163 = scalar_select %p160, %s161, %s162
      %p166 = pneg %p160
      %p167 = scmp.eq.s32.totalorder %s15, 1
      %p168 = por %p166, %p167
      %p169 = scmp.ne.s32.totalorder %s161, %s164
      %p170 = scmp.eq.s32.totalorder %s15, 0
      %p171 = por %p169, %p170
      %p172 = scmp.ne.s32.totalorder %s161, %s164
      %p173 = scmp.eq.s32.totalorder %s20, 1
      %p174 = por %p172, %p173
      %p175 = scmp.ne.s32.totalorder %s164, %s165
      %p176 = scmp.eq.s32.totalorder %s20, 0
      %p177 = por %p175, %p176
      %p178 = scmp.ne.s32.totalorder %s164, %s165
      %p179 = scmp.eq.s32.totalorder %s21, 1
      %p180 = por %p178, %p179
      %p182 = scmp.ne.s32.totalorder %s165, %s181
      %p183 = scmp.eq.s32.totalorder %s21, 0
      %p184 = por %p182, %p183
      %p185 = scmp.le.s32.totalorder 1, %s15
      %p186 = scmp.lt.s32.totalorder %s15, 3
      %p187 = pnand %p185, %p186
      %p188 = pneg %p187
      // Predicated region
      $region9: #{tpu_custom_call.1} parent=5 // pred_check
        _
      $region10: #{tpu_custom_call.1} parent=5 // pred_check_branch
        %190 = sbr.rel (%p187) target = $region12
      $region11: #{tpu_custom_call.1} parent=5 // pred_region
        %s191 = ssub.s32 %s15, 1
        // Predicated region
        $region13: #{tpu_custom_call.1} parent=11 // pred_check
          %p192 = pneg %p88
        $region14: #{tpu_custom_call.1} parent=11 // pred_check_branch
          %194 = sbr.rel (%p192) target = $region16
        $region15: #{tpu_custom_call.1} parent=11 // pred_region
          _
        $region16: #{tpu_custom_call.1} parent=11 // pred_fallthru
          _
        // Predicated region
        $region17: #{tpu_custom_call.1} parent=11 // pred_check
          %p195 = pneg %p109
        $region18: #{tpu_custom_call.1} parent=11 // pred_check_branch
          %197 = sbr.rel (%p195) target = $region20
        $region19: #{tpu_custom_call.1} parent=11 // pred_region
          _
        $region20: #{tpu_custom_call.1} parent=11 // pred_fallthru
          _
        // Predicated region
        $region21: #{tpu_custom_call.1} parent=11 // pred_check
          %p198 = pneg %p130
        $region22: #{tpu_custom_call.1} parent=11 // pred_check_branch
          %200 = sbr.rel (%p198) target = $region24
        $region23: #{tpu_custom_call.1} parent=11 // pred_region
          _
        $region24: #{tpu_custom_call.1} parent=11 // pred_fallthru
          _
        // Predicated region
        $region25: #{tpu_custom_call.1} parent=11 // pred_check
          %p201 = pneg %p151
        $region26: #{tpu_custom_call.1} parent=11 // pred_check_branch
          %203 = sbr.rel (%p201) target = $region28
        $region27: #{tpu_custom_call.1} parent=11 // pred_region
          _
        $region28: #{tpu_custom_call.1} parent=11 // pred_fallthru
          _
      $region12: #{tpu_custom_call.1} parent=5 // pred_fallthru
        _
      %p204 = scmp.lt.s32.totalorder %s15, 2
      // Predicated region
      $region29: #{tpu_custom_call.1} parent=5 // pred_check
        %p205 = pneg %p204
      $region30: #{tpu_custom_call.1} parent=5 // pred_check_branch
        %207 = sbr.rel (%p205) target = $region32
      $region31: #{tpu_custom_call.1} parent=5 // pred_region
        // Predicated region
        $region33: #{tpu_custom_call.1} parent=31 // pred_check
          %p208 = pneg %p35
        $region34: #{tpu_custom_call.1} parent=31 // pred_check_branch
          %210 = sbr.rel (%p208) target = $region36
        $region35: #{tpu_custom_call.1} parent=31 // pred_region
          %p211 = scmp.lt.s32.totalorder %s15, 1
          %s212 = scalar_select %p211, %s15, 1
          %s213 = smul.addr %s212, 4
          %s214 = scalar_lea.vmem %s0, %s213
        $region36: #{tpu_custom_call.1} parent=31 // pred_fallthru
          _
        // Predicated region
        $region37: #{tpu_custom_call.1} parent=31 // pred_check
          %p215 = pneg %p61
        $region38: #{tpu_custom_call.1} parent=31 // pred_check_branch
          %217 = sbr.rel (%p215) target = $region40
        $region39: #{tpu_custom_call.1} parent=31 // pred_region
          %p218 = scmp.lt.s32.totalorder %s15, 1
          %s219 = scalar_select %p218, %s15, 1
          %s220 = smul.addr %s219, 8
          %s221 = scalar_lea.vmem %s1, %s220
        $region40: #{tpu_custom_call.1} parent=31 // pred_fallthru
          _
      $region32: #{tpu_custom_call.1} parent=5 // pred_fallthru
        _
      %p222 = scmp.le.s32.totalorder 1, %s15
      %p223 = scmp.lt.s32.totalorder %s15, 3
      %p224 = pnand %p222, %p223
      %p225 = pneg %p224
      // Predicated region
      $region41: #{tpu_custom_call.1} parent=5 // pred_check
        _
      $region42: #{tpu_custom_call.1} parent=5 // pred_check_branch
        %227 = sbr.rel (%p224) target = $region44
      $region43: #{tpu_custom_call.1} parent=5 // pred_region
        %s228 = ssub.s32 %s15, 1
        %p229 = scmp.lt.s32.totalorder %s20, 1
        %s230 = scalar_select %p229, %s20, 1
        %s231 = smul.addr %s230, 4
        %s232 = scalar_lea.vmem %s0, %s231
        %p233 = pneg %p41
        %p234 = pneg %p38
        %p235 = scmp.lt.s32.totalorder %s20, 1
        %s236 = scalar_select %p235, %s20, 1
        %s237 = smul.addr %s236, 8
        %s238 = scalar_lea.vmem %s1, %s237
        %p239 = pneg %p67
        %p240 = pneg %p64
        %p241 = pneg %p88
        %p242 = pneg %p85
        %p243 = pneg %p109
        %p244 = pneg %p106
        %p245 = pneg %p130
        %p246 = pneg %p127
        %p247 = pneg %p151
        %p248 = pneg %p148
        %p249 = pneg %p177
        %p250 = pneg %p174
        %s251 = sand.u32 %s164, 1
        %s252 = scalar_lea.sflag [#allocation3], %s251
        %s253 = sand.u32 %s164, 1
        %s254 = smul.addr %s253, 8
        %s255 = scalar_lea.vmem [#allocation2], %s254
        %p256 = scmp.lt.s32.totalorder %s20, 1
        %s257 = scalar_select %p256, %s20, 1
        %s258 = smul.addr %s257, 4
        %s259 = scalar_lea.vmem %s0, %s258
        %p260 = scmp.lt.s32.totalorder %s20, 1
        %s261 = scalar_select %p260, %s20, 1
        %s262 = smul.addr %s261, 8
        %s263 = scalar_lea.vmem %s1, %s262
        %v265 = vld [vmem:[%s263] sm:$0xff]
        %v266 = vld [vmem:[%s259] sm:$0xf]
        %v267 = vld [vmem:[%s5] sm:$0x3]
        %v268 = vlaneseq
        %v269 = vand.u32 %v268, 127
        %270 = vset.pattern.permute.xlu0 2
        %271 = vperm.xlu0 %270, %v265
        %v272 = vpop.permute.xlu0 %271
        %vm273 = vcmp.eq.s32.totalorder %v269, %v272
        %v274 = vsel %vm273, 1, 0
        %v275 = vcvt.s32.f32 %v274
        %v276 = vld [vmem:[%s4] sm:$0x3]
        %vm277 = vcmask 15360
        %v279 = vsel %vm277, %v275, 0
        %vm281 = vcmask 1041408
        %v283 = vsel %vm281, %v276, 0
        %285 = vmatprep.subr.mxu0 0.0
        %286 = vmatpush1.msra.mxu0 0.0
        %287 = vmatprep.subr.mxu0 0.0
        %288 = vmatpush1.msra.mxu0 0.0
        %289 = vmatprep.subr.mxu0 0.0
        %290 = vmatpush1.msra.mxu0 0.0
        %291 = vmatprep.subr.mxu0 0.0
        %292 = vmatpush1.msra.mxu0 0.0
        %293 = vmatprep.subr.mxu0 0.0
        %294 = vmatpush1.msra.mxu0 0.0
        %295 = vmatprep.subr.mxu0 0.0
        %296 = vmatpush1.msra.mxu0 0.0
        %297 = vmatprep.subr.mxu0 0.0
        %298 = vmatpush1.msra.mxu0 0.0
        %299 = vmatprep.subr.mxu0 0.0
        %300 = vmatpush1.msra.mxu0 0.0
        %301 = vmatprep.subr.mxu0 0.0
        %302 = vmatpush1.msra.mxu0 0.0
        %303 = vmatprep.subr.mxu0 0.0
        %304 = vmatpush1.msra.mxu0 0.0
        %305 = vmatprep.subr.mxu0 0.0
        %306 = vmatpush1.msra.mxu0 0.0
        %307 = vmatprep.subr.mxu0 0.0
        %308 = vmatpush1.msra.mxu0 0.0
        %309 = vmatprep.subr.mxu0 0.0
        %310 = vmatpush1.msra.mxu0 0.0
        %311 = vmatprep.subr.mxu0 0.0
        %312 = vmatpush1.msra.mxu0 0.0
        %313 = vmatprep.subr.mxu0 0.0
        %314 = vmatpush1.msra.mxu0 0.0
        %315 = vmatprep.subr.mxu0 0.0
        %316 = vmatpush1.msra.mxu0 %v283
        %317 = vmatprep.subr.mxu0 0.0
        %318 = vmatpush2.msra.mxu0 0.0
        %319 = vmatprep.subr.mxu0 0.0
        %320 = vmatpush2.msra.mxu0 0.0
        %321 = vmatprep.subr.mxu0 0.0
        %322 = vmatpush2.msra.mxu0 0.0
        %323 = vmatprep.subr.mxu0 0.0
        %324 = vmatpush2.msra.mxu0 0.0
        %325 = vmatprep.subr.mxu0 0.0
        %326 = vmatpush2.msra.mxu0 0.0
        %327 = vmatprep.subr.mxu0 0.0
        %328 = vmatpush2.msra.mxu0 0.0
        %329 = vmatprep.subr.mxu0 0.0
        %330 = vmatpush2.msra.mxu0 0.0
        %331 = vmatprep.subr.mxu0 0.0
        %332 = vmatpush2.msra.mxu0 0.0
        %333 = vmatprep.subr.mxu0 0.0
        %334 = vmatpush2.msra.mxu0 0.0
        %335 = vmatprep.subr.mxu0 0.0
        %336 = vmatpush2.msra.mxu0 0.0
        %337 = vmatprep.subr.mxu0 0.0
        %338 = vmatpush2.msra.mxu0 0.0
        %339 = vmatprep.subr.mxu0 0.0
        %340 = vmatpush2.msra.mxu0 0.0
        %341 = vmatprep.subr.mxu0 0.0
        %342 = vmatpush2.msra.mxu0 0.0
        %343 = vmatprep.subr.mxu0 0.0
        %344 = vmatpush2.msra.mxu0 0.0
        %345 = vmatprep.subr.mxu0 0.0
        %346 = vmatpush2.msra.mxu0 0.0
        %347 = vmatprep.subr.mxu0 0.0
        %348 = vmatpush2.msra.mxu0 0.0
        %349 = vmatprep.mubr.f32.mxu0 0.0
        %350 = vmatmul.mubr.f32.gmra.mxu0 %v279
        %v351 = vpop.f32.mrf.mxu0
        %v352 = vadd.f32 0.0, %v351
        %v353 = vpop.f32.mrf.mxu0
        %354 = vdwg.mxu0
        %vm355 = vcmask 31744
        %v357 = vsel %vm355, %v266, 0
        %v360 = vsel %vm281, %v267, 0
        %362 = vmatprep.subr.bf16.mxu0 0
        %363 = vmatpush1.bf16.msra.mxu0 0
        %364 = vmatprep.subr.bf16.mxu0 0
        %365 = vmatpush1.bf16.msra.mxu0 0
        %366 = vmatprep.subr.bf16.mxu0 0
        %367 = vmatpush1.bf16.msra.mxu0 0
        %368 = vmatprep.subr.bf16.mxu0 0
        %369 = vmatpush1.bf16.msra.mxu0 0
        %370 = vmatprep.subr.bf16.mxu0 0
        %371 = vmatpush1.bf16.msra.mxu0 0
        %372 = vmatprep.subr.bf16.mxu0 0
        %373 = vmatpush1.bf16.msra.mxu0 0
        %374 = vmatprep.subr.bf16.mxu0 0
        %375 = vmatpush1.bf16.msra.mxu0 0
        %376 = vmatprep.subr.bf16.mxu0 0
        %377 = vmatpush1.bf16.msra.mxu0 %v360
        %378 = vmatprep.subr.bf16.mxu0 0
        %379 = vmatpush2.bf16.msra.mxu0 0
        %380 = vmatprep.subr.bf16.mxu0 0
        %381 = vmatpush2.bf16.msra.mxu0 0
        %382 = vmatprep.subr.bf16.mxu0 0
        %383 = vmatpush2.bf16.msra.mxu0 0
        %384 = vmatprep.subr.bf16.mxu0 0
        %385 = vmatpush2.bf16.msra.mxu0 0
        %386 = vmatprep.subr.bf16.mxu0 0
        %387 = vmatpush2.bf16.msra.mxu0 0
        %388 = vmatprep.subr.bf16.mxu0 0
        %389 = vmatpush2.bf16.msra.mxu0 0
        %390 = vmatprep.subr.bf16.mxu0 0
        %391 = vmatpush2.bf16.msra.mxu0 0
        %392 = vmatprep.subr.bf16.mxu0 0
        %393 = vmatpush2.bf16.msra.mxu0 0
        %394 = vmatprep.mubr.bf16.mxu0 0
        %395 = vmatmul.mubr.bf16.gmra.mxu0 %v357
        %v396 = vpop.f32.mrf.mxu0
        %v397 = vadd.f32 %v352, %v396
        %v398 = vpop.f32.mrf.mxu0
        %v399 = vpop.f32.mrf.mxu0
        %v400 = vpop.f32.mrf.mxu0
        %401 = vdwg.mxu0
        %402 = vset.pattern.permute.xlu0 0
        %403 = vperm.xlu0 %402, %v265
        %v404 = vpop.permute.xlu0 %403
        %vm405 = vcmp.eq.s32.totalorder %v269, %v404
        %v406 = vsel %vm405, 1, 0
        %v407 = vcvt.s32.f32 %v406
        %v408 = vpack.c.bf16 %v407, %v407
        %409 = vset.pattern.permute.xlu0 1
        %410 = vperm.xlu0 %409, %v265
        %v411 = vpop.permute.xlu0 %410
        %vm412 = vcmp.eq.s32.totalorder %v269, %v411
        %v413 = vsel %vm412, 1, 0
        %v414 = vcvt.s32.f32 %v413
        %v415 = vpack.c.bf16 %v414, %v414
        %v416 = vld [vmem:[%s2] sm:$0xf]
        %v417 = vld [vmem:[%s2 + $0x4] sm:$0xf]
        %v418 = vld [vmem:[%s2 + $0x8] sm:$0xf]
        %v422 = vunpack.c.l.b16 %v416
        %v423 = vunpack.c.l.b16 %v417
        %v424 = vunpack.c.l.b16 %v418
        %v425 = vpack.c.b16 %v423, %v422
        %v426 = vpack.c.b16 %v424, %v424
        %vm428 = vcmask 195584
        %v430 = vsel %vm428, %v408, 0
        %vm432 = vcmask 1043456
        %v434 = vsel %vm432, %v426, 0
        %436 = vmatprep.subr.bf16.mxu0 0
        %437 = vmatpush1.bf16.msra.mxu0 0
        %438 = vmatprep.subr.bf16.mxu0 0
        %439 = vmatpush1.bf16.msra.mxu0 0
        %440 = vmatprep.subr.bf16.mxu0 0
        %441 = vmatpush1.bf16.msra.mxu0 0
        %442 = vmatprep.subr.bf16.mxu0 0
        %443 = vmatpush1.bf16.msra.mxu0 0
        %444 = vmatprep.subr.bf16.mxu0 0
        %445 = vmatpush1.bf16.msra.mxu0 0
        %446 = vmatprep.subr.bf16.mxu0 0
        %447 = vmatpush1.bf16.msra.mxu0 0
        %448 = vmatprep.subr.bf16.mxu0 0
        %449 = vmatpush1.bf16.msra.mxu0 %v434
        %450 = vmatprep.subr.bf16.mxu0 0
        %451 = vmatpush1.bf16.msra.mxu0 %v425
        %452 = vmatprep.subr.bf16.mxu0 0
        %453 = vmatpush2.bf16.msra.mxu0 0
        %454 = vmatprep.subr.bf16.mxu0 0
        %455 = vmatpush2.bf16.msra.mxu0 0
        %456 = vmatprep.subr.bf16.mxu0 0
        %457 = vmatpush2.bf16.msra.mxu0 0
        %458 = vmatprep.subr.bf16.mxu0 0
        %459 = vmatpush2.bf16.msra.mxu0 0
        %460 = vmatprep.subr.bf16.mxu0 0
        %461 = vmatpush2.bf16.msra.mxu0 0
        %462 = vmatprep.subr.bf16.mxu0 0
        %463 = vmatpush2.bf16.msra.mxu0 0
        %464 = vmatprep.subr.bf16.mxu0 0
        %465 = vmatpush2.bf16.msra.mxu0 0
        %466 = vmatprep.subr.bf16.mxu0 0
        %467 = vmatpush2.bf16.msra.mxu0 0
        %468 = vmatprep.mubr.bf16.mxu0 0
        %469 = vmatmul.mubr.bf16.gmra.mxu0 %v430
        %v470 = vpop.f32.mrf.mxu0
        %v471 = vadd.f32 0.0, %v470
        %v472 = vpop.f32.mrf.mxu0
        %v473 = vpop.f32.mrf.mxu0
        %v474 = vpop.f32.mrf.mxu0
        %475 = vdwg.mxu0
        %v476 = vadd.f32 %v397, %v471
        %v477 = vld [vmem:[%s3] sm:$0xf]
        %v478 = vld [vmem:[%s3 + $0x4] sm:$0xf]
        %v479 = vld [vmem:[%s3 + $0x8] sm:$0xf]
        %v483 = vunpack.c.l.b16 %v477
        %v484 = vunpack.c.l.b16 %v478
        %v485 = vunpack.c.l.b16 %v479
        %v486 = vpack.c.b16 %v484, %v483
        %v487 = vpack.c.b16 %v485, %v485
        %v490 = vsel %vm428, %v415, 0
        %v493 = vsel %vm432, %v487, 0
        %495 = vmatprep.subr.bf16.mxu0 0
        %496 = vmatpush1.bf16.msra.mxu0 0
        %497 = vmatprep.subr.bf16.mxu0 0
        %498 = vmatpush1.bf16.msra.mxu0 0
        %499 = vmatprep.subr.bf16.mxu0 0
        %500 = vmatpush1.bf16.msra.mxu0 0
        %501 = vmatprep.subr.bf16.mxu0 0
        %502 = vmatpush1.bf16.msra.mxu0 0
        %503 = vmatprep.subr.bf16.mxu0 0
        %504 = vmatpush1.bf16.msra.mxu0 0
        %505 = vmatprep.subr.bf16.mxu0 0
        %506 = vmatpush1.bf16.msra.mxu0 0
        %507 = vmatprep.subr.bf16.mxu0 0
        %508 = vmatpush1.bf16.msra.mxu0 %v493
        %509 = vmatprep.subr.bf16.mxu0 0
        %510 = vmatpush1.bf16.msra.mxu0 %v486
        %511 = vmatprep.subr.bf16.mxu0 0
        %512 = vmatpush2.bf16.msra.mxu0 0
        %513 = vmatprep.subr.bf16.mxu0 0
        %514 = vmatpush2.bf16.msra.mxu0 0
        %515 = vmatprep.subr.bf16.mxu0 0
        %516 = vmatpush2.bf16.msra.mxu0 0
        %517 = vmatprep.subr.bf16.mxu0 0
        %518 = vmatpush2.bf16.msra.mxu0 0
        %519 = vmatprep.subr.bf16.mxu0 0
        %520 = vmatpush2.bf16.msra.mxu0 0
        %521 = vmatprep.subr.bf16.mxu0 0
        %522 = vmatpush2.bf16.msra.mxu0 0
        %523 = vmatprep.subr.bf16.mxu0 0
        %524 = vmatpush2.bf16.msra.mxu0 0
        %525 = vmatprep.subr.bf16.mxu0 0
        %526 = vmatpush2.bf16.msra.mxu0 0
        %527 = vmatprep.mubr.bf16.mxu0 0
        %528 = vmatmul.mubr.bf16.gmra.mxu0 %v490
        %v529 = vpop.f32.mrf.mxu0
        %v530 = vadd.f32 0.0, %v529
        %v531 = vpop.f32.mrf.mxu0
        %v532 = vpop.f32.mrf.mxu0
        %v533 = vpop.f32.mrf.mxu0
        %534 = vdwg.mxu0
        %v535 = vadd.f32 %v476, %v530
        %v536 = vmax.f32 %v535, 0.0
        %537 = vst [vmem:[%s255] sm:$0xff] %v536
        %s538 = sand.u32 %s164, 1
        %s539 = scalar_lea.sflag [#allocation3], %s538
        %s540 = sand.u32 %s164, 1
        %s541 = smul.addr %s540, 8
        %s542 = scalar_lea.vmem [#allocation2], %s541
        // Predicated region
        $region45: #{tpu_custom_call.1} parent=43 // pred_check
          %p543 = pneg %p174
        $region46: #{tpu_custom_call.1} parent=43 // pred_check_branch
          %545 = sbr.rel (%p543) target = $region48
        $region47: #{tpu_custom_call.1} parent=43 // pred_region
          %s547 = ssub.s32 128, 128
          %548 = vsyncadd %s539, %s547
          %s549 = smul.addr %s20, 128
          %s550 = scalar_lea.hbm %s6, %s549
          %s552 = sshll.u32 %s542, 4
          %s553 = int_to_ptr.vmem [resolvable:$true] %s552
          %555 = dma.vmem_to_hbm [thread:$0]  %s553, 128, %s550, %s539
        $region48: #{tpu_custom_call.1} parent=43 // pred_fallthru
          _
      $region44: #{tpu_custom_call.1} parent=5 // pred_fallthru
        _
      %p556 = scmp.le.s32.totalorder 2, %s15
      // Predicated region
      $region49: #{tpu_custom_call.1} parent=5 // pred_check
        %p557 = pneg %p556
      $region50: #{tpu_custom_call.1} parent=5 // pred_check_branch
        %559 = sbr.rel (%p557) target = $region52
      $region51: #{tpu_custom_call.1} parent=5 // pred_region
        %s560 = ssub.s32 %s15, 2
        // Predicated region
        $region53: #{tpu_custom_call.1} parent=51 // pred_check
          %p561 = pneg %p180
        $region54: #{tpu_custom_call.1} parent=51 // pred_check_branch
          %563 = sbr.rel (%p561) target = $region56
        $region55: #{tpu_custom_call.1} parent=51 // pred_region
          %s564 = sand.u32 %s165, 1
          %s565 = scalar_lea.sflag [#allocation3], %s564
          %s566 = sand.u32 %s165, 1
          %s567 = smul.addr %s566, 8
          %s568 = scalar_lea.vmem [#allocation2], %s567
          %569 = dma.done %s565, 128
        $region56: #{tpu_custom_call.1} parent=51 // pred_fallthru
          _
      $region52: #{tpu_custom_call.1} parent=5 // pred_fallthru
        _
    $region6: #{tpu_custom_call.1} parent=1 // loop_footer
      %s19 = sadd.s32 1, %s15
    $region7: #{tpu_custom_call.1} parent=1 // loop_footer_branch
      %14 = sbr.rel target = $region3
    $region8: #{tpu_custom_call.1} parent=1 // loop_exit
      _
    %570 = vsyncpa [#allocation3], 1
    %s571 = scalar_lea.sflag [#allocation3], 1
    %572 = vsyncpa %s571, 1

</llo_original>
